<compile_context>
chip_gen: v6e
topology: v6e:2x2x1
jax: 0.10.0
libtpu: 0.0.40
codegen_flags: <defaults>
</compile_context>

<pallas_src>
import math
from functools import partial

import jax
import jax.numpy as jnp
from jax.experimental import pallas as pl
from jax.experimental.pallas import tpu as pltpu


def _round_up(x, m):
    return ((x + m - 1) // m) * m


def _leconv_kernel(a_ref, vcol_ref, vrow_ref, wcat_ref, o_ref, acc_ref, *, feat):
    # a_ref:    (1, L, TN, TK)      A block (edge-type major) for this (i, k)
    # vcol_ref: (1, TK, F_pad)      V columns for this k step: [V | 1 | 0...]
    # vrow_ref: (1, TN, F_pad)      V rows of this output tile (constant in k)
    # wcat_ref: ((1+2L)*F_pad, C)   fused [w1; w2_l; -w3_l] slabs, f32
    # o_ref:    (1, TN, C)
    # acc_ref:  (L, TN, F_pad) f32  per-edge-type [A_l @ V | deg_l | 0...]
    k = pl.program_id(2)

    @pl.when(k == 0)
    def _init():
        acc_ref[...] = jnp.zeros_like(acc_ref)

    num_edges = a_ref.shape[1]
    v_cols = vcol_ref[0]                                     # (TK, F_pad)
    for l in range(num_edges):                               # static, unrolled
        acc_ref[l] += jnp.dot(a_ref[0, l], v_cols,
                              preferred_element_type=jnp.float32)

    @pl.when(k == pl.num_programs(2) - 1)
    def _epilogue():
        v_row = vrow_ref[0].astype(jnp.float32)              # (TN, F_pad)
        agg = acc_ref[...]                                   # (L, TN, F_pad)
        # X_cat = [V | deg_1*V .. deg_L*V | A_1@V .. A_L@V]; every piece is an
        # F_pad (multiple of 128) lane slab, so the concat is vreg-aligned.
        pieces = [v_row]
        for l in range(num_edges):
            deg_l = agg[l, :, feat:feat + 1]                 # (TN, 1)
            pieces.append(deg_l * v_row)
        for l in range(num_edges):
            pieces.append(agg[l])
        x_cat = jnp.concatenate(pieces, axis=-1)             # (TN, (1+2L)*F_pad)
        z = jnp.dot(x_cat, wcat_ref[...],
                    preferred_element_type=jnp.float32)      # (TN, C)
        o_ref[0] = pl.reciprocal(1.0 + jnp.exp(-z), approx=True).astype(o_ref.dtype)


def _choose_tiles(n, num_edges, itemsize):
    """Pick (tn, tk, n_pad).  tk must be a multiple of 128 or span the whole
    padded axis; the double-buffered A block is kept under ~16 MiB."""
    if n <= 512:
        t = _round_up(max(n, 1), 8)
        return t, t, t                        # single block on both axes
    tn = 256
    n_pad = _round_up(n, tn)
    if num_edges * tn * n_pad * itemsize <= 8 * 1024 * 1024:
        return tn, n_pad, n_pad               # full-width columns (nk == 1)
    return tn, 512, _round_up(n, 512)         # lcm(256, 512) = 512


def leconv_multi_edge(V, A, w1, w2, w3, *, compute_dtype=jnp.bfloat16,
                      a_is_edge_major=False, tile_rows=None, tile_cols=None):
    """V: (B, N, F); A: (B, N, N, L) (or (B, L, N, N) if a_is_edge_major);
    w1: (F, C); w2, w3: (L*F, C).  Returns (B, N, C) in V.dtype."""
    B, N, F = V.shape
    if a_is_edge_major:
        Ba, L, Na, Nb = A.shape
    else:
        Ba, Na, Nb, L = A.shape
    assert Ba == B and Na == N and Nb == N
    Fw, C = w1.shape
    assert Fw == F and w2.shape == (L * F, C) and w3.shape == (L * F, C)

    compute_dtype = jnp.dtype(compute_dtype)
    isz = compute_dtype.itemsize

    # --- tiling over N (row tiles i, reduction column tiles k) ---
    if tile_rows is not None or tile_cols is not None:
        tn = tile_rows if tile_rows is not None else _round_up(min(N, 256), 8)
        tk = tile_cols if tile_cols is not None else tn
        n_pad = _round_up(N, math.lcm(tn, tk))
    else:
        tn, tk, n_pad = _choose_tiles(N, L, isz)
    assert tn % 8 == 0 and n_pad % tn == 0 and n_pad % tk == 0
    assert tk % 128 == 0 or tk == n_pad
    pn = n_pad - N

    # Feature slab: F features + one "ones" column (degree trick), zero-padded
    # to a multiple of 128 so the epilogue lane concatenation stays aligned.
    F_pad = _round_up(F + 1, 128)
    K_cat = (1 + 2 * L) * F_pad

    # --- operand prep (XLA side) ---
    # TODO(synk): for large N, feed A directly in (B, L, N, N) layout from the
    # producer (a_is_edge_major=True) — or validate allow_input_fusion — so the
    # transpose below does not cost an extra HBM round-trip of A.
    A_lm = A if a_is_edge_major else jnp.transpose(A, (0, 3, 1, 2))
    A_lm = A_lm.astype(compute_dtype)
    if pn:
        A_lm = jnp.pad(A_lm, ((0, 0), (0, 0), (0, pn), (0, pn)))

    V_ext = jnp.zeros((B, n_pad, F_pad), compute_dtype)
    V_ext = V_ext.at[:, :N, :F].set(V.astype(compute_dtype))
    V_ext = V_ext.at[:, :N, F].set(1.0)

    # Fused weights: [w1; w2_1..w2_L; -w3_1..-w3_L], each F x C block padded to
    # an F_pad-row slab (rows >= F are zero, so the ones/pad columns of X_cat
    # contribute nothing).  Weights stay f32: tiny, keeps precision.
    def _slab(w):
        return jnp.pad(w.astype(jnp.float32), ((0, F_pad - F), (0, 0)))
    w2r = w2.reshape(L, F, C)
    w3r = w3.reshape(L, F, C)
    wcat = jnp.concatenate([_slab(w1)]
                           + [_slab(w2r[l]) for l in range(L)]
                           + [_slab(-w3r[l]) for l in range(L)], axis=0)

    grid = (B, n_pad // tn, n_pad // tk)

    # --- VMEM budget: double-buffered blocks + scratch + epilogue temps ---
    fp = (2 * L * tn * tk * isz          # A blocks
          + 2 * tk * F_pad * isz         # V column blocks
          + 2 * tn * F_pad * isz         # V row blocks
          + 2 * K_cat * C * 4            # fused weights
          + 2 * tn * C * 4               # output blocks
          + L * tn * F_pad * 4           # accumulator scratch
          + 2 * tn * K_cat * 4)          # epilogue X_cat temporaries
    vmem_limit = int(min(48 * 2**20, max(fp + 8 * 2**20, 32 * 2**20)))

    out = pl.pallas_call(
        partial(_leconv_kernel, feat=F),
        out_shape=jax.ShapeDtypeStruct((B, n_pad, C), V.dtype),
        grid=grid,
        in_specs=[
            # A block: this row tile x this reduction column tile, all L types.
            pl.BlockSpec((1, L, tn, tk), lambda b, i, k: (b, 0, i, k)),
            # V columns (with ones column) for this reduction step.
            pl.BlockSpec((1, tk, F_pad), lambda b, i, k: (b, k, 0)),
            # V rows of this output tile (constant across k).
            pl.BlockSpec((1, tn, F_pad), lambda b, i, k: (b, i, 0)),
            # Fused weights: resident across the whole grid.
            pl.BlockSpec((K_cat, C), lambda b, i, k: (0, 0)),
        ],
        out_specs=pl.BlockSpec((1, tn, C), lambda b, i, k: (b, i, 0)),
        scratch_shapes=[pltpu.VMEM((L, tn, F_pad), jnp.float32)],
        compiler_params=pltpu.CompilerParams(
            dimension_semantics=("parallel", "parallel", "arbitrary"),
            vmem_limit_bytes=vmem_limit),
    )(A_lm, V_ext, V_ext, wcat)

    return out[:, :N, :]


def init_params(key, input_dim, output_dim, num_edges):
    """w1 ~ xavier_normal_ (matches LinearEmbedding); w2/w3 are left
    UNinitialized in the PyTorch module (torch.FloatTensor), so we use small
    xavier-like values for deterministic, sane numerics."""
    k1, k2, k3 = jax.random.split(key, 3)
    xav1 = math.sqrt(2.0 / (input_dim + output_dim))
    w1 = jax.random.normal(k1, (input_dim, output_dim), jnp.float32) * xav1
    xav2 = math.sqrt(2.0 / (input_dim * num_edges + output_dim))
    w2 = jax.random.normal(k2, (input_dim * num_edges, output_dim), jnp.float32) * xav2
    w3 = jax.random.normal(k3, (input_dim * num_edges, output_dim), jnp.float32) * xav2
    return w1, w2, w3


def leconv_ref(V, A, w1, w2, w3):
    """Plain-JAX reference of the intended forward (high-precision matmuls)."""
    B, N, F = V.shape
    L = A.shape[-1]
    hi = jax.lax.Precision.HIGHEST
    term1 = jnp.matmul(V, w1, precision=hi)                              # (B,N,C)
    sum_A = jnp.sum(A, axis=2)                                           # (B,N,L)
    x2 = (sum_A[:, :, :, None] * V[:, :, None, :]).reshape(B, N, L * F)
    term2 = jnp.matmul(x2, w2, precision=hi)
    agg = jnp.einsum("bijl,bjf->bilf", A, V, precision=hi).reshape(B, N, L * F)
    term3 = jnp.matmul(agg, w3, precision=hi)
    return jax.nn.sigmoid(term1 + term2 - term3)


if __name__ == "__main__":
    # TODO(synk): use_bn / apply_bn path not implemented (module default is
    # use_bn=False, and apply_bn builds a fresh nn.BatchNorm1d every forward).
    key = jax.random.PRNGKey(0)
    kv, ka, kp, kv2, ka2 = jax.random.split(key, 5)

    # --- small, single-tile test (f32 operands) ---
    B, N, F, C, L = 2, 8, 32, 32, 4
    V = jax.random.normal(kv, (B, N, F), jnp.float32)
    A = jax.random.uniform(ka, (B, N, N, L), jnp.float32)
    w1, w2, w3 = init_params(kp, F, C, L)
    ref = leconv_ref(V, A, w1, w2, w3)

    out_f32 = jax.block_until_ready(
        leconv_multi_edge(V, A, w1, w2, w3, compute_dtype=jnp.float32))
    assert out_f32.shape == (B, N, C)
    err = float(jnp.max(jnp.abs(out_f32 - ref)))
    assert err < 1e-2, f"f32 path max_err={err}"      # slack for approx recip

    # --- default bf16 operand path (f32 accumulation) ---
    out_bf16 = jax.block_until_ready(leconv_multi_edge(V, A, w1, w2, w3))
    err = float(jnp.max(jnp.abs(out_bf16 - ref)))
    assert err < 5e-2, f"bf16 path max_err={err}"

    # --- multi-tile / padded path: N not a multiple of the tiles, forced
    #     row tile 64 and reduction column tile 128 -> grid (B, 4, 2). ---
    N2 = 200
    V2 = jax.random.normal(kv2, (B, N2, F), jnp.float32)
    A2 = jax.random.uniform(ka2, (B, N2, N2, L), jnp.float32) * (4.0 / N2)
    ref2 = leconv_ref(V2, A2, w1, w2, w3)
    out2 = jax.block_until_ready(
        leconv_multi_edge(V2, A2, w1, w2, w3, compute_dtype=jnp.float32,
                          tile_rows=64, tile_cols=128))
    err2 = float(jnp.max(jnp.abs(out2 - ref2)))
    assert err2 < 1e-2, f"tiled/padded path max_err={err2}"

    print("KERNEL_OK")
</pallas_src>

<mosaic_0001>
module attributes {stable_mosaic.version = 11 : i64} {
  func.func @_leconv_kernel(%arg0: i32, %arg1: i32, %arg2: i32, %arg3: memref<1x4x8x8xf32, #tpu.memory_space<vmem>>, %arg4: memref<1x8x128xf32, #tpu.memory_space<vmem>>, %arg5: memref<1x8x128xf32, #tpu.memory_space<vmem>>, %arg6: memref<1152x32xf32, #tpu.memory_space<vmem>>, %arg7: memref<1x8x32xf32, #tpu.memory_space<vmem>>, %arg8: memref<4x8x128xf32, #tpu.memory_space<vmem>>) attributes {dimension_semantics = [#tpu.dimension_semantics<parallel>, #tpu.dimension_semantics<parallel>, #tpu.dimension_semantics<arbitrary>], iteration_bounds = array<i64: 2, 1, 1>, scalar_prefetch = 0 : i64, scratch_operands = 1 : i64, tpu.core_type = #tpu.core_type<tc>, window_params = [{transform_indices = @transform_0, window_bounds = array<i64: 1, 4, 8, 8>}, {transform_indices = @transform_1, window_bounds = array<i64: 1, 8, 128>}, {transform_indices = @transform_2, window_bounds = array<i64: 1, 8, 128>}, {pipeline_mode = #tpu.pipeline_mode<synchronous>, transform_indices = @transform_3, window_bounds = array<i64: 1152, 32>}, {transform_indices = @transform_4, window_bounds = array<i64: 1, 8, 32>}]} {
    %c0_i32 = arith.constant 0 : i32
    %0 = arith.cmpi eq, %arg2, %c0_i32 : i32
    %1 = arith.extui %0 : i1 to i32
    %c0_i32_0 = arith.constant 0 : i32
    %2 = arith.cmpi ne, %1, %c0_i32_0 : i32
    scf.if %2 {
      %cst_45 = arith.constant 0.000000e+00 : f32
      %44 = vector.broadcast %cst_45 : f32 to vector<4x8x128xf32>
      %c0_46 = arith.constant 0 : index
      %c0_47 = arith.constant 0 : index
      %c0_48 = arith.constant 0 : index
      %45 = vector.load %arg8[%c0_46, %c0_47, %c0_48] : memref<4x8x128xf32, #tpu.memory_space<vmem>>, vector<4x8x128xf32>
      tpu.vector_store %arg8[%c0_46, %c0_47, %c0_48], %44 {strides = array<i32>} : memref<4x8x128xf32, #tpu.memory_space<vmem>>, vector<4x8x128xf32>,
    } else {
    }
    %c0 = arith.constant 0 : index
    %c0_1 = arith.constant 0 : index
    %c0_2 = arith.constant 0 : index
    %3 = vector.load %arg4[%c0, %c0_1, %c0_2] : memref<1x8x128xf32, #tpu.memory_space<vmem>>, vector<1x8x128xf32>
    %4 = vector.shape_cast %3 : vector<1x8x128xf32> to vector<8x128xf32>
    %c0_3 = arith.constant 0 : index
    %c0_4 = arith.constant 0 : index
    %c0_5 = arith.constant 0 : index
    %5 = vector.load %arg8[%c0_3, %c0_4, %c0_5] : memref<4x8x128xf32, #tpu.memory_space<vmem>>, vector<1x8x128xf32>
    %6 = vector.shape_cast %5 : vector<1x8x128xf32> to vector<8x128xf32>
    %c0_6 = arith.constant 0 : index
    %c0_7 = arith.constant 0 : index
    %c0_8 = arith.constant 0 : index
    %c0_9 = arith.constant 0 : index
    %7 = vector.load %arg3[%c0_6, %c0_7, %c0_8, %c0_9] : memref<1x4x8x8xf32, #tpu.memory_space<vmem>>, vector<1x1x8x8xf32>
    %8 = vector.shape_cast %7 : vector<1x1x8x8xf32> to vector<8x8xf32>
    %cst = arith.constant dense<0.000000e+00> : vector<8x128xf32>
    %9 = tpu.matmul %8, %4, %cst {dimension_numbers = #tpu.dot_dimension_numbers<[1], [0], [0], [1], [0, 0, 1, 1], [], []>} : vector<8x8xf32>, vector<8x128xf32>, vector<8x128xf32> -> vector<8x128xf32>
    %10 = arith.addf %6, %9 : vector<8x128xf32>
    %c0_10 = arith.constant 0 : index
    %c0_11 = arith.constant 0 : index
    %c0_12 = arith.constant 0 : index
    %11 = vector.load %arg8[%c0_10, %c0_11, %c0_12] : memref<4x8x128xf32, #tpu.memory_space<vmem>>, vector<1x8x128xf32>
    %12 = vector.shape_cast %11 : vector<1x8x128xf32> to vector<8x128xf32>
    %13 = vector.shape_cast %10 : vector<8x128xf32> to vector<1x8x128xf32>
    tpu.vector_store %arg8[%c0_10, %c0_11, %c0_12], %13 {strides = array<i32>} : memref<4x8x128xf32, #tpu.memory_space<vmem>>, vector<1x8x128xf32>,
    %c1 = arith.constant 1 : index
    %c0_13 = arith.constant 0 : index
    %c0_14 = arith.constant 0 : index
    %14 = vector.load %arg8[%c1, %c0_13, %c0_14] : memref<4x8x128xf32, #tpu.memory_space<vmem>>, vector<1x8x128xf32>
    %15 = vector.shape_cast %14 : vector<1x8x128xf32> to vector<8x128xf32>
    %c0_15 = arith.constant 0 : index
    %c1_16 = arith.constant 1 : index
    %c0_17 = arith.constant 0 : index
    %c0_18 = arith.constant 0 : index
    %16 = vector.load %arg3[%c0_15, %c1_16, %c0_17, %c0_18] : memref<1x4x8x8xf32, #tpu.memory_space<vmem>>, vector<1x1x8x8xf32>
    %17 = vector.shape_cast %16 : vector<1x1x8x8xf32> to vector<8x8xf32>
    %cst_19 = arith.constant dense<0.000000e+00> : vector<8x128xf32>
    %18 = tpu.matmul %17, %4, %cst_19 {dimension_numbers = #tpu.dot_dimension_numbers<[1], [0], [0], [1], [0, 0, 1, 1], [], []>} : vector<8x8xf32>, vector<8x128xf32>, vector<8x128xf32> -> vector<8x128xf32>
    %19 = arith.addf %15, %18 : vector<8x128xf32>
    %c1_20 = arith.constant 1 : index
    %c0_21 = arith.constant 0 : index
    %c0_22 = arith.constant 0 : index
    %20 = vector.load %arg8[%c1_20, %c0_21, %c0_22] : memref<4x8x128xf32, #tpu.memory_space<vmem>>, vector<1x8x128xf32>
    %21 = vector.shape_cast %20 : vector<1x8x128xf32> to vector<8x128xf32>
    %22 = vector.shape_cast %19 : vector<8x128xf32> to vector<1x8x128xf32>
    tpu.vector_store %arg8[%c1_20, %c0_21, %c0_22], %22 {strides = array<i32>} : memref<4x8x128xf32, #tpu.memory_space<vmem>>, vector<1x8x128xf32>,
    %c2 = arith.constant 2 : index
    %c0_23 = arith.constant 0 : index
    %c0_24 = arith.constant 0 : index
    %23 = vector.load %arg8[%c2, %c0_23, %c0_24] : memref<4x8x128xf32, #tpu.memory_space<vmem>>, vector<1x8x128xf32>
    %24 = vector.shape_cast %23 : vector<1x8x128xf32> to vector<8x128xf32>
    %c0_25 = arith.constant 0 : index
    %c2_26 = arith.constant 2 : index
    %c0_27 = arith.constant 0 : index
    %c0_28 = arith.constant 0 : index
    %25 = vector.load %arg3[%c0_25, %c2_26, %c0_27, %c0_28] : memref<1x4x8x8xf32, #tpu.memory_space<vmem>>, vector<1x1x8x8xf32>
    %26 = vector.shape_cast %25 : vector<1x1x8x8xf32> to vector<8x8xf32>
    %cst_29 = arith.constant dense<0.000000e+00> : vector<8x128xf32>
    %27 = tpu.matmul %26, %4, %cst_29 {dimension_numbers = #tpu.dot_dimension_numbers<[1], [0], [0], [1], [0, 0, 1, 1], [], []>} : vector<8x8xf32>, vector<8x128xf32>, vector<8x128xf32> -> vector<8x128xf32>
    %28 = arith.addf %24, %27 : vector<8x128xf32>
    %c2_30 = arith.constant 2 : index
    %c0_31 = arith.constant 0 : index
    %c0_32 = arith.constant 0 : index
    %29 = vector.load %arg8[%c2_30, %c0_31, %c0_32] : memref<4x8x128xf32, #tpu.memory_space<vmem>>, vector<1x8x128xf32>
    %30 = vector.shape_cast %29 : vector<1x8x128xf32> to vector<8x128xf32>
    %31 = vector.shape_cast %28 : vector<8x128xf32> to vector<1x8x128xf32>
    tpu.vector_store %arg8[%c2_30, %c0_31, %c0_32], %31 {strides = array<i32>} : memref<4x8x128xf32, #tpu.memory_space<vmem>>, vector<1x8x128xf32>,
    %c3 = arith.constant 3 : index
    %c0_33 = arith.constant 0 : index
    %c0_34 = arith.constant 0 : index
    %32 = vector.load %arg8[%c3, %c0_33, %c0_34] : memref<4x8x128xf32, #tpu.memory_space<vmem>>, vector<1x8x128xf32>
    %33 = vector.shape_cast %32 : vector<1x8x128xf32> to vector<8x128xf32>
    %c0_35 = arith.constant 0 : index
    %c3_36 = arith.constant 3 : index
    %c0_37 = arith.constant 0 : index
    %c0_38 = arith.constant 0 : index
    %34 = vector.load %arg3[%c0_35, %c3_36, %c0_37, %c0_38] : memref<1x4x8x8xf32, #tpu.memory_space<vmem>>, vector<1x1x8x8xf32>
    %35 = vector.shape_cast %34 : vector<1x1x8x8xf32> to vector<8x8xf32>
    %cst_39 = arith.constant dense<0.000000e+00> : vector<8x128xf32>
    %36 = tpu.matmul %35, %4, %cst_39 {dimension_numbers = #tpu.dot_dimension_numbers<[1], [0], [0], [1], [0, 0, 1, 1], [], []>} : vector<8x8xf32>, vector<8x128xf32>, vector<8x128xf32> -> vector<8x128xf32>
    %37 = arith.addf %33, %36 : vector<8x128xf32>
    %c3_40 = arith.constant 3 : index
    %c0_41 = arith.constant 0 : index
    %c0_42 = arith.constant 0 : index
    %38 = vector.load %arg8[%c3_40, %c0_41, %c0_42] : memref<4x8x128xf32, #tpu.memory_space<vmem>>, vector<1x8x128xf32>
    %39 = vector.shape_cast %38 : vector<1x8x128xf32> to vector<8x128xf32>
    %40 = vector.shape_cast %37 : vector<8x128xf32> to vector<1x8x128xf32>
    tpu.vector_store %arg8[%c3_40, %c0_41, %c0_42], %40 {strides = array<i32>} : memref<4x8x128xf32, #tpu.memory_space<vmem>>, vector<1x8x128xf32>,
    %c0_i32_43 = arith.constant 0 : i32
    %41 = arith.cmpi eq, %arg2, %c0_i32_43 : i32
    %42 = arith.extui %41 : i1 to i32
    %c0_i32_44 = arith.constant 0 : i32
    %43 = arith.cmpi ne, %42, %c0_i32_44 : i32
    scf.if %43 {
      %c0_45 = arith.constant 0 : index
      %c0_46 = arith.constant 0 : index
      %c0_47 = arith.constant 0 : index
      %44 = vector.load %arg5[%c0_45, %c0_46, %c0_47] : memref<1x8x128xf32, #tpu.memory_space<vmem>>, vector<1x8x128xf32>
      %45 = vector.shape_cast %44 : vector<1x8x128xf32> to vector<8x128xf32>
      %c0_48 = arith.constant 0 : index
      %c0_49 = arith.constant 0 : index
      %c0_50 = arith.constant 0 : index
      %46 = vector.load %arg8[%c0_48, %c0_49, %c0_50] : memref<4x8x128xf32, #tpu.memory_space<vmem>>, vector<4x8x128xf32>
      %47 = vector.extract_strided_slice %46 {offsets = [0, 0, 32], sizes = [1, 8, 1], strides = [1, 1, 1]} : vector<4x8x128xf32> to vector<1x8x1xf32>
      %48 = vector.shape_cast %47 : vector<1x8x1xf32> to vector<8x1xf32>
      %49 = vector.broadcast %48 : vector<8x1xf32> to vector<8x128xf32>
      %50 = arith.mulf %49, %45 : vector<8x128xf32>
      %51 = vector.extract_strided_slice %46 {offsets = [1, 0, 32], sizes = [1, 8, 1], strides = [1, 1, 1]} : vector<4x8x128xf32> to vector<1x8x1xf32>
      %52 = vector.shape_cast %51 : vector<1x8x1xf32> to vector<8x1xf32>
      %53 = vector.broadcast %52 : vector<8x1xf32> to vector<8x128xf32>
      %54 = arith.mulf %53, %45 : vector<8x128xf32>
      %55 = vector.extract_strided_slice %46 {offsets = [2, 0, 32], sizes = [1, 8, 1], strides = [1, 1, 1]} : vector<4x8x128xf32> to vector<1x8x1xf32>
      %56 = vector.shape_cast %55 : vector<1x8x1xf32> to vector<8x1xf32>
      %57 = vector.broadcast %56 : vector<8x1xf32> to vector<8x128xf32>
      %58 = arith.mulf %57, %45 : vector<8x128xf32>
      %59 = vector.extract_strided_slice %46 {offsets = [3, 0, 32], sizes = [1, 8, 1], strides = [1, 1, 1]} : vector<4x8x128xf32> to vector<1x8x1xf32>
      %60 = vector.shape_cast %59 : vector<1x8x1xf32> to vector<8x1xf32>
      %61 = vector.broadcast %60 : vector<8x1xf32> to vector<8x128xf32>
      %62 = arith.mulf %61, %45 : vector<8x128xf32>
      %63 = vector.extract_strided_slice %46 {offsets = [0, 0, 0], sizes = [1, 8, 128], strides = [1, 1, 1]} : vector<4x8x128xf32> to vector<1x8x128xf32>
      %64 = vector.shape_cast %63 : vector<1x8x128xf32> to vector<8x128xf32>
      %65 = vector.extract_strided_slice %46 {offsets = [1, 0, 0], sizes = [1, 8, 128], strides = [1, 1, 1]} : vector<4x8x128xf32> to vector<1x8x128xf32>
      %66 = vector.shape_cast %65 : vector<1x8x128xf32> to vector<8x128xf32>
      %67 = vector.extract_strided_slice %46 {offsets = [2, 0, 0], sizes = [1, 8, 128], strides = [1, 1, 1]} : vector<4x8x128xf32> to vector<1x8x128xf32>
      %68 = vector.shape_cast %67 : vector<1x8x128xf32> to vector<8x128xf32>
      %69 = vector.extract_strided_slice %46 {offsets = [3, 0, 0], sizes = [1, 8, 128], strides = [1, 1, 1]} : vector<4x8x128xf32> to vector<1x8x128xf32>
      %70 = vector.shape_cast %69 : vector<1x8x128xf32> to vector<8x128xf32>
      %71 = tpu.concatenate %45, %50, %54, %58, %62, %64, %66, %68, %70 in 1 : vector<8x128xf32>, vector<8x128xf32>, vector<8x128xf32>, vector<8x128xf32>, vector<8x128xf32>, vector<8x128xf32>, vector<8x128xf32>, vector<8x128xf32>, vector<8x128xf32> -> vector<8x1152xf32>
      %c0_51 = arith.constant 0 : index
      %c0_52 = arith.constant 0 : index
      %72 = vector.load %arg6[%c0_51, %c0_52] : memref<1152x32xf32, #tpu.memory_space<vmem>>, vector<1152x32xf32>
      %cst_53 = arith.constant dense<0.000000e+00> : vector<8x32xf32>
      %73 = tpu.matmul %71, %72, %cst_53 {dimension_numbers = #tpu.dot_dimension_numbers<[1], [0], [0], [1], [0, 0, 1, 1], [], []>} : vector<8x1152xf32>, vector<1152x32xf32>, vector<8x32xf32> -> vector<8x32xf32>
      %cst_54 = arith.constant 0.000000e+00 : f32
      %74 = vector.broadcast %cst_54 : f32 to vector<8x32xf32>
      %75 = arith.subf %74, %73 : vector<8x32xf32>
      %76 = math.exp %75 : vector<8x32xf32>
      %cst_55 = arith.constant 1.000000e+00 : f32
      %77 = vector.broadcast %cst_55 : f32 to vector<8x32xf32>
      %78 = arith.addf %77, %76 : vector<8x32xf32>
      %79 = tpu.reciprocal %78 {approx = true} : vector<8x32xf32> -> vector<8x32xf32>
      %c0_56 = arith.constant 0 : index
      %c0_57 = arith.constant 0 : index
      %c0_58 = arith.constant 0 : index
      %80 = vector.load %arg7[%c0_56, %c0_57, %c0_58] : memref<1x8x32xf32, #tpu.memory_space<vmem>>, vector<1x8x32xf32>
      %81 = vector.shape_cast %80 : vector<1x8x32xf32> to vector<8x32xf32>
      %82 = vector.shape_cast %79 : vector<8x32xf32> to vector<1x8x32xf32>
      tpu.vector_store %arg7[%c0_56, %c0_57, %c0_58], %82 {strides = array<i32>} : memref<1x8x32xf32, #tpu.memory_space<vmem>>, vector<1x8x32xf32>,
    } else {
    }
    return
  }
  func.func @transform_0(%arg0: i32, %arg1: i32, %arg2: i32) -> (i32, i32, i32, i32) {
    %c0_i32 = arith.constant 0 : i32
    %c0_i32_0 = arith.constant 0 : i32
    return %arg0, %c0_i32, %arg1, %arg2 : i32, i32, i32, i32
  }
  func.func @transform_1(%arg0: i32, %arg1: i32, %arg2: i32) -> (i32, i32, i32) {
    %c0_i32 = arith.constant 0 : i32
    %c0_i32_0 = arith.constant 0 : i32
    return %arg0, %arg2, %c0_i32 : i32, i32, i32
  }
  func.func @transform_2(%arg0: i32, %arg1: i32, %arg2: i32) -> (i32, i32, i32) {
    %c0_i32 = arith.constant 0 : i32
    %c0_i32_0 = arith.constant 0 : i32
    return %arg0, %arg1, %c0_i32 : i32, i32, i32
  }
  func.func @transform_3(%arg0: i32, %arg1: i32, %arg2: i32) -> (i32, i32) {
    %c0_i32 = arith.constant 0 : i32
    %c0_i32_0 = arith.constant 0 : i32
    %c0_i32_1 = arith.constant 0 : i32
    return %c0_i32, %c0_i32_0 : i32, i32
  }
  func.func @transform_4(%arg0: i32, %arg1: i32, %arg2: i32) -> (i32, i32, i32) {
    %c0_i32 = arith.constant 0 : i32
    %c0_i32_0 = arith.constant 0 : i32
    return %arg0, %arg1, %c0_i32 : i32, i32, i32
  }
}

</mosaic_0001>

<llo_original>
// kernel: tpu_custom_call.1
$region0: #{tpu_custom_call.1}
  #allocation0 [shape = 'u32[]', space=smem, size = 0x4, offset = 0x4, fixed_abs, tag = 'smem constant byte address 0x4 - core index']
  #allocation1 [shape = 'u32[144,128]{1,0:T(1,128)}', space=vmem, size = 0x12000, scoped, tag = 'internal scratch']
  #allocation2 [shape = 'f32[4,8,128]{2,1,0:T(8,128)}', space=vmem, size = 0x4000, scoped, tag = 'scratch operand']
  %s0 = inlined_call_operand.vmem [shape: f32[2,4,8,8], index: 0, kind: input, shape index: {}]
  %s1 = inlined_call_operand.vmem [shape: f32[2,8,128], index: 1, kind: input, shape index: {}]
  %s2 = inlined_call_operand.vmem [shape: f32[2,8,128], index: 2, kind: input, shape index: {}]
  %s3 = inlined_call_operand.vmem [shape: f32[1152,32], index: 3, kind: input, shape index: {}]
  %s4 = inlined_call_operand.hbm [shape: f32[2,8,32], index: 4, kind: output, shape index: {}]
  %s5 = sld [smem:[#allocation0]]
  $region57: #{tpu_custom_call.1} parent=0
    _
  %s7 = ssub.s32 1, %s5
  %s8 = scalar_select 0, %s7, %s5
  $region1: #{tpu_custom_call.1} parent=0
    #allocation3 [shape = 'u8[8192]{0}', space=vmem, size = 0x2000, scoped, tag = 'output window, operand 0']
    #allocation4 [shape = 's32[2]{0}', space=sflag, size = 0x8, scoped, tag = 'scoped memory for tpu_custom_call.1']
    %9 = vsyncpa [#allocation4], 0
    %s10 = scalar_lea.sflag [#allocation4], 1
    %11 = vsyncpa %s10, 0
    loop: start=0, step=1, limit=4
    $region2: #{tpu_custom_call.1} parent=1 // loop_pre_header
      _
    $region3: #{tpu_custom_call.1} parent=1 // loop_header
      %s13 = sphi 0, %s17
      %p14 = scmp.ge.s32.totalorder %s13, 4
      %s20 = sphi 0, %s39
      %s21 = sphi 0, %s35
      %s22 = sphi 0, %s31
      %s23 = sphi 0, %s20
      %s24 = sphi 0, %s21
      %s25 = sphi 0, %s22
      %s26 = sphi 0, %s23
      %s27 = sphi 0, %s24
      %s28 = sphi 0, %s25
      %s46 = sphi 0, %s48
      %s49 = sphi 0, %s46
      %s50 = sphi 0, %s49
      %s66 = sphi 0, %s50
      %s74 = sphi 0, %s76
      %s77 = sphi 0, %s74
      %s78 = sphi 0, %s77
      %s94 = sphi 0, %s78
      %s102 = sphi 0, %s104
      %s105 = sphi 0, %s102
      %s106 = sphi 0, %s105
      %s122 = sphi 0, %s106
      %s126 = sphi 0, %s126
      %s128 = sphi 0, %s126
      %s129 = sphi 0, %s128
      %s143 = sphi 0, %s129
      %s151 = sphi 0, %s153
      %s154 = sphi 0, %s151
      %s155 = sphi 0, %s154
      %s171 = sphi 0, %s155
    $region4: #{tpu_custom_call.1} parent=1 // loop_header_branch
      %16 = sbr.rel (%p14) target = $region8
    $region5: #{tpu_custom_call.1} parent=1 // loop_body
      %s18 = ssub.s32 %s13, 1
      %s19 = ssub.s32 %s13, 2
      %s29 = sadd.s32 1, %s22
      %p30 = scmp.ge.s32.totalorder %s29, 1
      %s31 = scalar_select %p30, 0, %s29
      %s32 = sadd.s32 1, %s21
      %s33 = scalar_select %p30, %s32, %s21
      %p34 = scmp.ge.s32.totalorder %s33, 1
      %s35 = scalar_select %p34, 0, %s33
      %s36 = sadd.s32 1, %s20
      %s37 = scalar_select %p34, %s36, %s20
      %p38 = scmp.ge.s32.totalorder %s37, 2
      %s39 = scalar_select %p38, 0, %s37
      %s40 = ssub.s32 %s20, %s39
      %s41 = ssub.s32 %s21, %s35
      %s42 = sor.u32 %s40, %s41
      %s43 = ssub.s32 %s22, %s31
      %s44 = sor.u32 %s42, %s43
      %p45 = scmp.eq.s32.totalorder %s44, 0
      %s47 = sadd.s32 %s46, 1
      %s48 = scalar_select %p45, %s46, %s47
      %p51 = pneg %p45
      %p52 = scmp.eq.s32.totalorder %s13, 1
      %p53 = por %p51, %p52
      %p54 = scmp.ne.s32.totalorder %s46, %s49
      %p55 = scmp.eq.s32.totalorder %s13, 0
      %p56 = por %p54, %p55
      %p57 = scmp.ne.s32.totalorder %s46, %s49
      %p58 = scmp.eq.s32.totalorder %s18, 1
      %p59 = por %p57, %p58
      %p60 = scmp.ne.s32.totalorder %s49, %s50
      %p61 = scmp.eq.s32.totalorder %s18, 0
      %p62 = por %p60, %p61
      %p63 = scmp.ne.s32.totalorder %s49, %s50
      %p64 = scmp.eq.s32.totalorder %s19, 1
      %p65 = por %p63, %p64
      %p67 = scmp.ne.s32.totalorder %s50, %s66
      %p68 = scmp.eq.s32.totalorder %s19, 0
      %p69 = por %p67, %p68
      %s70 = ssub.s32 %s20, %s39
      %s71 = ssub.s32 %s22, %s31
      %s72 = sor.u32 %s70, %s71
      %p73 = scmp.eq.s32.totalorder %s72, 0
      %s75 = sadd.s32 %s74, 1
      %s76 = scalar_select %p73, %s74, %s75
      %p79 = pneg %p73
      %p80 = scmp.eq.s32.totalorder %s13, 1
      %p81 = por %p79, %p80
      %p82 = scmp.ne.s32.totalorder %s74, %s77
      %p83 = scmp.eq.s32.totalorder %s13, 0
      %p84 = por %p82, %p83
      %p85 = scmp.ne.s32.totalorder %s74, %s77
      %p86 = scmp.eq.s32.totalorder %s18, 1
      %p87 = por %p85, %p86
      %p88 = scmp.ne.s32.totalorder %s77, %s78
      %p89 = scmp.eq.s32.totalorder %s18, 0
      %p90 = por %p88, %p89
      %p91 = scmp.ne.s32.totalorder %s77, %s78
      %p92 = scmp.eq.s32.totalorder %s19, 1
      %p93 = por %p91, %p92
      %p95 = scmp.ne.s32.totalorder %s78, %s94
      %p96 = scmp.eq.s32.totalorder %s19, 0
      %p97 = por %p95, %p96
      %s98 = ssub.s32 %s20, %s39
      %s99 = ssub.s32 %s21, %s35
      %s100 = sor.u32 %s98, %s99
      %p101 = scmp.eq.s32.totalorder %s100, 0
      %s103 = sadd.s32 %s102, 1
      %s104 = scalar_select %p101, %s102, %s103
      %p107 = pneg %p101
      %p108 = scmp.eq.s32.totalorder %s13, 1
      %p109 = por %p107, %p108
      %p110 = scmp.ne.s32.totalorder %s102, %s105
      %p111 = scmp.eq.s32.totalorder %s13, 0
      %p112 = por %p110, %p111
      %p113 = scmp.ne.s32.totalorder %s102, %s105
      %p114 = scmp.eq.s32.totalorder %s18, 1
      %p115 = por %p113, %p114
      %p116 = scmp.ne.s32.totalorder %s105, %s106
      %p117 = scmp.eq.s32.totalorder %s18, 0
      %p118 = por %p116, %p117
      %p119 = scmp.ne.s32.totalorder %s105, %s106
      %p120 = scmp.eq.s32.totalorder %s19, 1
      %p121 = por %p119, %p120
      %p123 = scmp.ne.s32.totalorder %s106, %s122
      %p124 = scmp.eq.s32.totalorder %s19, 0
      %p125 = por %p123, %p124
      %s127 = sadd.s32 %s126, 1
      %p130 = scmp.eq.s32.totalorder %s13, 1
      %p131 = scmp.ne.s32.totalorder %s126, %s128
      %p132 = scmp.eq.s32.totalorder %s13, 0
      %p133 = por %p131, %p132
      %p134 = scmp.ne.s32.totalorder %s126, %s128
      %p135 = scmp.eq.s32.totalorder %s18, 1
      %p136 = por %p134, %p135
      %p137 = scmp.ne.s32.totalorder %s128, %s129
      %p138 = scmp.eq.s32.totalorder %s18, 0
      %p139 = por %p137, %p138
      %p140 = scmp.ne.s32.totalorder %s128, %s129
      %p141 = scmp.eq.s32.totalorder %s19, 1
      %p142 = por %p140, %p141
      %p144 = scmp.ne.s32.totalorder %s129, %s143
      %p145 = scmp.eq.s32.totalorder %s19, 0
      %p146 = por %p144, %p145
      %s147 = ssub.s32 %s20, %s39
      %s148 = ssub.s32 %s21, %s35
      %s149 = sor.u32 %s147, %s148
      %p150 = scmp.eq.s32.totalorder %s149, 0
      %s152 = sadd.s32 %s151, 1
      %s153 = scalar_select %p150, %s151, %s152
      %p156 = pneg %p150
      %p157 = scmp.eq.s32.totalorder %s13, 1
      %p158 = por %p156, %p157
      %p159 = scmp.ne.s32.totalorder %s151, %s154
      %p160 = scmp.eq.s32.totalorder %s13, 0
      %p161 = por %p159, %p160
      %p162 = scmp.ne.s32.totalorder %s151, %s154
      %p163 = scmp.eq.s32.totalorder %s18, 1
      %p164 = por %p162, %p163
      %p165 = scmp.ne.s32.totalorder %s154, %s155
      %p166 = scmp.eq.s32.totalorder %s18, 0
      %p167 = por %p165, %p166
      %p168 = scmp.ne.s32.totalorder %s154, %s155
      %p169 = scmp.eq.s32.totalorder %s19, 1
      %p170 = por %p168, %p169
      %p172 = scmp.ne.s32.totalorder %s155, %s171
      %p173 = scmp.eq.s32.totalorder %s19, 0
      %p174 = por %p172, %p173
      %p175 = scmp.le.s32.totalorder 1, %s13
      %p176 = scmp.lt.s32.totalorder %s13, 3
      %p177 = pnand %p175, %p176
      %p178 = pneg %p177
      // Predicated region
      $region9: #{tpu_custom_call.1} parent=5 // pred_check
        _
      $region10: #{tpu_custom_call.1} parent=5 // pred_check_branch
        %180 = sbr.rel (%p177) target = $region12
      $region11: #{tpu_custom_call.1} parent=5 // pred_region
        %s181 = ssub.s32 %s13, 1
        // Predicated region
        $region13: #{tpu_custom_call.1} parent=11 // pred_check
          %p182 = pneg %p139
        $region14: #{tpu_custom_call.1} parent=11 // pred_check_branch
          %184 = sbr.rel (%p182) target = $region16
        $region15: #{tpu_custom_call.1} parent=11 // pred_region
          _
        $region16: #{tpu_custom_call.1} parent=11 // pred_fallthru
          _
      $region12: #{tpu_custom_call.1} parent=5 // pred_fallthru
        _
      %p185 = scmp.lt.s32.totalorder %s13, 2
      // Predicated region
      $region17: #{tpu_custom_call.1} parent=5 // pred_check
        %p186 = pneg %p185
      $region18: #{tpu_custom_call.1} parent=5 // pred_check_branch
        %188 = sbr.rel (%p186) target = $region20
      $region19: #{tpu_custom_call.1} parent=5 // pred_region
        // Predicated region
        $region21: #{tpu_custom_call.1} parent=19 // pred_check
          %p189 = pneg %p56
        $region22: #{tpu_custom_call.1} parent=19 // pred_check_branch
          %191 = sbr.rel (%p189) target = $region24
        $region23: #{tpu_custom_call.1} parent=19 // pred_region
          %p192 = scmp.lt.s32.totalorder %s20, 1
          %s193 = scalar_select %p192, %s20, 1
          %p194 = scmp.lt.s32.totalorder %s21, 0
          %s195 = scalar_select %p194, %s21, 0
          %p196 = scmp.lt.s32.totalorder %s22, 0
          %s197 = scalar_select %p196, %s22, 0
          %s198 = sadd.s32 %s197, %s195
          %s199 = smul.addr %s193, 4
          %s200 = sadd.s32 %s198, %s199
          %s201 = smul.addr %s200, 8
          %s202 = scalar_lea.vmem %s0, %s201
        $region24: #{tpu_custom_call.1} parent=19 // pred_fallthru
          _
        // Predicated region
        $region25: #{tpu_custom_call.1} parent=19 // pred_check
          %p203 = pneg %p84
        $region26: #{tpu_custom_call.1} parent=19 // pred_check_branch
          %205 = sbr.rel (%p203) target = $region28
        $region27: #{tpu_custom_call.1} parent=19 // pred_region
          %p206 = scmp.lt.s32.totalorder %s20, 1
          %s207 = scalar_select %p206, %s20, 1
          %p208 = scmp.lt.s32.totalorder %s22, 0
          %s209 = scalar_select %p208, %s22, 0
          %s210 = sadd.s32 %s209, %s207
          %s211 = smul.addr %s210, 8
          %s212 = scalar_lea.vmem %s1, %s211
        $region28: #{tpu_custom_call.1} parent=19 // pred_fallthru
          _
        // Predicated region
        $region29: #{tpu_custom_call.1} parent=19 // pred_check
          %p213 = pneg %p112
        $region30: #{tpu_custom_call.1} parent=19 // pred_check_branch
          %215 = sbr.rel (%p213) target = $region32
        $region31: #{tpu_custom_call.1} parent=19 // pred_region
          %p216 = scmp.lt.s32.totalorder %s20, 1
          %s217 = scalar_select %p216, %s20, 1
          %p218 = scmp.lt.s32.totalorder %s21, 0
          %s219 = scalar_select %p218, %s21, 0
          %s220 = sadd.s32 %s219, %s217
          %s221 = smul.addr %s220, 8
          %s222 = scalar_lea.vmem %s2, %s221
        $region32: #{tpu_custom_call.1} parent=19 // pred_fallthru
          _
      $region20: #{tpu_custom_call.1} parent=5 // pred_fallthru
        _
      %p223 = scmp.le.s32.totalorder 1, %s13
      %p224 = scmp.lt.s32.totalorder %s13, 3
      %p225 = pnand %p223, %p224
      %p226 = pneg %p225
      // Predicated region
      $region33: #{tpu_custom_call.1} parent=5 // pred_check
        _
      $region34: #{tpu_custom_call.1} parent=5 // pred_check_branch
        %228 = sbr.rel (%p225) target = $region36
      $region35: #{tpu_custom_call.1} parent=5 // pred_region
        %s229 = ssub.s32 %s13, 1
        %p230 = scmp.lt.s32.totalorder %s23, 1
        %s231 = scalar_select %p230, %s23, 1
        %p232 = scmp.lt.s32.totalorder %s24, 0
        %s233 = scalar_select %p232, %s24, 0
        %p234 = scmp.lt.s32.totalorder %s25, 0
        %s235 = scalar_select %p234, %s25, 0
        %s236 = sadd.s32 %s235, %s233
        %s237 = smul.addr %s231, 4
        %s238 = sadd.s32 %s236, %s237
        %s239 = smul.addr %s238, 8
        %s240 = scalar_lea.vmem %s0, %s239
        %p241 = pneg %p62
        %p242 = pneg %p59
        %p243 = scmp.lt.s32.totalorder %s23, 1
        %s244 = scalar_select %p243, %s23, 1
        %p245 = scmp.lt.s32.totalorder %s25, 0
        %s246 = scalar_select %p245, %s25, 0
        %s247 = sadd.s32 %s246, %s244
        %s248 = smul.addr %s247, 8
        %s249 = scalar_lea.vmem %s1, %s248
        %p250 = pneg %p90
        %p251 = pneg %p87
        %p252 = scmp.lt.s32.totalorder %s23, 1
        %s253 = scalar_select %p252, %s23, 1
        %p254 = scmp.lt.s32.totalorder %s24, 0
        %s255 = scalar_select %p254, %s24, 0
        %s256 = sadd.s32 %s255, %s253
        %s257 = smul.addr %s256, 8
        %s258 = scalar_lea.vmem %s2, %s257
        %p259 = pneg %p118
        %p260 = pneg %p115
        %p261 = pneg %p139
        %p262 = pneg %p136
        %p263 = pneg %p167
        %p264 = pneg %p164
        %s265 = sand.u32 %s154, 1
        %s266 = scalar_lea.sflag [#allocation4], %s265
        %s267 = sand.u32 %s154, 1
        %s268 = smul.addr %s267, 8
        %s269 = scalar_lea.vmem [#allocation3], %s268
        %p270 = scmp.lt.s32.totalorder %s23, 1
        %s271 = scalar_select %p270, %s23, 1
        %p272 = scmp.lt.s32.totalorder %s24, 0
        %s273 = scalar_select %p272, %s24, 0
        %p274 = scmp.lt.s32.totalorder %s25, 0
        %s275 = scalar_select %p274, %s25, 0
        %s276 = sadd.s32 %s275, %s273
        %s277 = smul.addr %s271, 4
        %s278 = sadd.s32 %s276, %s277
        %s279 = smul.addr %s278, 8
        %s280 = scalar_lea.vmem %s0, %s279
        %p281 = scmp.lt.s32.totalorder %s23, 1
        %s282 = scalar_select %p281, %s23, 1
        %p283 = scmp.lt.s32.totalorder %s25, 0
        %s284 = scalar_select %p283, %s25, 0
        %s285 = sadd.s32 %s284, %s282
        %s286 = smul.addr %s285, 8
        %s287 = scalar_lea.vmem %s1, %s286
        %p288 = scmp.lt.s32.totalorder %s23, 1
        %s289 = scalar_select %p288, %s23, 1
        %p290 = scmp.lt.s32.totalorder %s24, 0
        %s291 = scalar_select %p290, %s24, 0
        %s292 = sadd.s32 %s291, %s289
        %s293 = smul.addr %s292, 8
        %s294 = scalar_lea.vmem %s2, %s293
        %p295 = scmp.eq.s32.totalorder %s25, 0
        // Predicated region
        $region37: #{tpu_custom_call.1} parent=35 // pred_check
          %p296 = pneg %p295
        $region38: #{tpu_custom_call.1} parent=35 // pred_check_branch
          %298 = sbr.rel (%p296) target = $region40
        $region39: #{tpu_custom_call.1} parent=35 // pred_region
          %299 = vst [vmem:[#allocation2] sm:$0xff] 0.0
          %300 = vst [vmem:[#allocation2 + $0x8] sm:$0xff] 0.0
          %301 = vst [vmem:[#allocation2 + $0x10] sm:$0xff] 0.0
          %302 = vst [vmem:[#allocation2 + $0x18] sm:$0xff] 0.0
        $region40: #{tpu_custom_call.1} parent=35 // pred_fallthru
          _
        %v303 = vld [vmem:[%s287] sm:$0xff]
        %v304 = vld [vmem:[#allocation2] sm:$0xff]
        %v305 = vld [vmem:[%s280] sm:$0xff]
        %vm306 = vcmask 64512
        %v308 = vsel %vm306, %v305, 0
        %310 = vmatprep.subr.mxu0 0.0
        %311 = vmatpush1.msra.mxu0 0.0
        %312 = vmatprep.subr.mxu0 0.0
        %313 = vmatpush1.msra.mxu0 0.0
        %314 = vmatprep.subr.mxu0 0.0
        %315 = vmatpush1.msra.mxu0 0.0
        %316 = vmatprep.subr.mxu0 0.0
        %317 = vmatpush1.msra.mxu0 0.0
        %318 = vmatprep.subr.mxu0 0.0
        %319 = vmatpush1.msra.mxu0 0.0
        %320 = vmatprep.subr.mxu0 0.0
        %321 = vmatpush1.msra.mxu0 0.0
        %322 = vmatprep.subr.mxu0 0.0
        %323 = vmatpush1.msra.mxu0 0.0
        %324 = vmatprep.subr.mxu0 0.0
        %325 = vmatpush1.msra.mxu0 0.0
        %326 = vmatprep.subr.mxu0 0.0
        %327 = vmatpush1.msra.mxu0 0.0
        %328 = vmatprep.subr.mxu0 0.0
        %329 = vmatpush1.msra.mxu0 0.0
        %330 = vmatprep.subr.mxu0 0.0
        %331 = vmatpush1.msra.mxu0 0.0
        %332 = vmatprep.subr.mxu0 0.0
        %333 = vmatpush1.msra.mxu0 0.0
        %334 = vmatprep.subr.mxu0 0.0
        %335 = vmatpush1.msra.mxu0 0.0
        %336 = vmatprep.subr.mxu0 0.0
        %337 = vmatpush1.msra.mxu0 0.0
        %338 = vmatprep.subr.mxu0 0.0
        %339 = vmatpush1.msra.mxu0 0.0
        %340 = vmatprep.subr.mxu0 0.0
        %341 = vmatpush1.msra.mxu0 %v303
        %342 = vmatprep.subr.mxu0 0.0
        %343 = vmatpush2.msra.mxu0 0.0
        %344 = vmatprep.subr.mxu0 0.0
        %345 = vmatpush2.msra.mxu0 0.0
        %346 = vmatprep.subr.mxu0 0.0
        %347 = vmatpush2.msra.mxu0 0.0
        %348 = vmatprep.subr.mxu0 0.0
        %349 = vmatpush2.msra.mxu0 0.0
        %350 = vmatprep.subr.mxu0 0.0
        %351 = vmatpush2.msra.mxu0 0.0
        %352 = vmatprep.subr.mxu0 0.0
        %353 = vmatpush2.msra.mxu0 0.0
        %354 = vmatprep.subr.mxu0 0.0
        %355 = vmatpush2.msra.mxu0 0.0
        %356 = vmatprep.subr.mxu0 0.0
        %357 = vmatpush2.msra.mxu0 0.0
        %358 = vmatprep.subr.mxu0 0.0
        %359 = vmatpush2.msra.mxu0 0.0
        %360 = vmatprep.subr.mxu0 0.0
        %361 = vmatpush2.msra.mxu0 0.0
        %362 = vmatprep.subr.mxu0 0.0
        %363 = vmatpush2.msra.mxu0 0.0
        %364 = vmatprep.subr.mxu0 0.0
        %365 = vmatpush2.msra.mxu0 0.0
        %366 = vmatprep.subr.mxu0 0.0
        %367 = vmatpush2.msra.mxu0 0.0
        %368 = vmatprep.subr.mxu0 0.0
        %369 = vmatpush2.msra.mxu0 0.0
        %370 = vmatprep.subr.mxu0 0.0
        %371 = vmatpush2.msra.mxu0 0.0
        %372 = vmatprep.subr.mxu0 0.0
        %373 = vmatpush2.msra.mxu0 0.0
        %374 = vmatprep.mubr.f32.mxu0 0.0
        %375 = vmatmul.mubr.f32.gmra.mxu0 %v308
        %v376 = vpop.f32.mrf.mxu0
        %v377 = vadd.f32 0.0, %v376
        %v378 = vpop.f32.mrf.mxu0
        %379 = vdwg.mxu0
        %v380 = vadd.f32 %v304, %v377
        %381 = vst [vmem:[#allocation2] sm:$0xff] %v380
        %s382 = scalar_lea.vmem [#allocation2], 8
        %v383 = vld [vmem:[%s382] sm:$0xff]
        %s384 = scalar_lea.vmem %s280, 8
        %v385 = vld [vmem:[%s384] sm:$0xff]
        %v387 = vsel %vm306, %v385, 0
        %389 = vmatprep.subr.mxu0 0.0
        %390 = vmatpush1.msra.mxu0 0.0
        %391 = vmatprep.subr.mxu0 0.0
        %392 = vmatpush1.msra.mxu0 0.0
        %393 = vmatprep.subr.mxu0 0.0
        %394 = vmatpush1.msra.mxu0 0.0
        %395 = vmatprep.subr.mxu0 0.0
        %396 = vmatpush1.msra.mxu0 0.0
        %397 = vmatprep.subr.mxu0 0.0
        %398 = vmatpush1.msra.mxu0 0.0
        %399 = vmatprep.subr.mxu0 0.0
        %400 = vmatpush1.msra.mxu0 0.0
        %401 = vmatprep.subr.mxu0 0.0
        %402 = vmatpush1.msra.mxu0 0.0
        %403 = vmatprep.subr.mxu0 0.0
        %404 = vmatpush1.msra.mxu0 0.0
        %405 = vmatprep.subr.mxu0 0.0
        %406 = vmatpush1.msra.mxu0 0.0
        %407 = vmatprep.subr.mxu0 0.0
        %408 = vmatpush1.msra.mxu0 0.0
        %409 = vmatprep.subr.mxu0 0.0
        %410 = vmatpush1.msra.mxu0 0.0
        %411 = vmatprep.subr.mxu0 0.0
        %412 = vmatpush1.msra.mxu0 0.0
        %413 = vmatprep.subr.mxu0 0.0
        %414 = vmatpush1.msra.mxu0 0.0
        %415 = vmatprep.subr.mxu0 0.0
        %416 = vmatpush1.msra.mxu0 0.0
        %417 = vmatprep.subr.mxu0 0.0
        %418 = vmatpush1.msra.mxu0 0.0
        %419 = vmatprep.subr.mxu0 0.0
        %420 = vmatpush1.msra.mxu0 %v303
        %421 = vmatprep.subr.mxu0 0.0
        %422 = vmatpush2.msra.mxu0 0.0
        %423 = vmatprep.subr.mxu0 0.0
        %424 = vmatpush2.msra.mxu0 0.0
        %425 = vmatprep.subr.mxu0 0.0
        %426 = vmatpush2.msra.mxu0 0.0
        %427 = vmatprep.subr.mxu0 0.0
        %428 = vmatpush2.msra.mxu0 0.0
        %429 = vmatprep.subr.mxu0 0.0
        %430 = vmatpush2.msra.mxu0 0.0
        %431 = vmatprep.subr.mxu0 0.0
        %432 = vmatpush2.msra.mxu0 0.0
        %433 = vmatprep.subr.mxu0 0.0
        %434 = vmatpush2.msra.mxu0 0.0
        %435 = vmatprep.subr.mxu0 0.0
        %436 = vmatpush2.msra.mxu0 0.0
        %437 = vmatprep.subr.mxu0 0.0
        %438 = vmatpush2.msra.mxu0 0.0
        %439 = vmatprep.subr.mxu0 0.0
        %440 = vmatpush2.msra.mxu0 0.0
        %441 = vmatprep.subr.mxu0 0.0
        %442 = vmatpush2.msra.mxu0 0.0
        %443 = vmatprep.subr.mxu0 0.0
        %444 = vmatpush2.msra.mxu0 0.0
        %445 = vmatprep.subr.mxu0 0.0
        %446 = vmatpush2.msra.mxu0 0.0
        %447 = vmatprep.subr.mxu0 0.0
        %448 = vmatpush2.msra.mxu0 0.0
        %449 = vmatprep.subr.mxu0 0.0
        %450 = vmatpush2.msra.mxu0 0.0
        %451 = vmatprep.subr.mxu0 0.0
        %452 = vmatpush2.msra.mxu0 0.0
        %453 = vmatprep.mubr.f32.mxu0 0.0
        %454 = vmatmul.mubr.f32.gmra.mxu0 %v387
        %v455 = vpop.f32.mrf.mxu0
        %v456 = vadd.f32 0.0, %v455
        %v457 = vpop.f32.mrf.mxu0
        %458 = vdwg.mxu0
        %v459 = vadd.f32 %v383, %v456
        %460 = vst [vmem:[%s382] sm:$0xff] %v459
        %s461 = scalar_lea.vmem [#allocation2], 16
        %v462 = vld [vmem:[%s461] sm:$0xff]
        %s463 = scalar_lea.vmem %s280, 16
        %v464 = vld [vmem:[%s463] sm:$0xff]
        %v466 = vsel %vm306, %v464, 0
        %468 = vmatprep.subr.mxu0 0.0
        %469 = vmatpush1.msra.mxu0 0.0
        %470 = vmatprep.subr.mxu0 0.0
        %471 = vmatpush1.msra.mxu0 0.0
        %472 = vmatprep.subr.mxu0 0.0
        %473 = vmatpush1.msra.mxu0 0.0
        %474 = vmatprep.subr.mxu0 0.0
        %475 = vmatpush1.msra.mxu0 0.0
        %476 = vmatprep.subr.mxu0 0.0
        %477 = vmatpush1.msra.mxu0 0.0
        %478 = vmatprep.subr.mxu0 0.0
        %479 = vmatpush1.msra.mxu0 0.0
        %480 = vmatprep.subr.mxu0 0.0
        %481 = vmatpush1.msra.mxu0 0.0
        %482 = vmatprep.subr.mxu0 0.0
        %483 = vmatpush1.msra.mxu0 0.0
        %484 = vmatprep.subr.mxu0 0.0
        %485 = vmatpush1.msra.mxu0 0.0
        %486 = vmatprep.subr.mxu0 0.0
        %487 = vmatpush1.msra.mxu0 0.0
        %488 = vmatprep.subr.mxu0 0.0
        %489 = vmatpush1.msra.mxu0 0.0
        %490 = vmatprep.subr.mxu0 0.0
        %491 = vmatpush1.msra.mxu0 0.0
        %492 = vmatprep.subr.mxu0 0.0
        %493 = vmatpush1.msra.mxu0 0.0
        %494 = vmatprep.subr.mxu0 0.0
        %495 = vmatpush1.msra.mxu0 0.0
        %496 = vmatprep.subr.mxu0 0.0
        %497 = vmatpush1.msra.mxu0 0.0
        %498 = vmatprep.subr.mxu0 0.0
        %499 = vmatpush1.msra.mxu0 %v303
        %500 = vmatprep.subr.mxu0 0.0
        %501 = vmatpush2.msra.mxu0 0.0
        %502 = vmatprep.subr.mxu0 0.0
        %503 = vmatpush2.msra.mxu0 0.0
        %504 = vmatprep.subr.mxu0 0.0
        %505 = vmatpush2.msra.mxu0 0.0
        %506 = vmatprep.subr.mxu0 0.0
        %507 = vmatpush2.msra.mxu0 0.0
        %508 = vmatprep.subr.mxu0 0.0
        %509 = vmatpush2.msra.mxu0 0.0
        %510 = vmatprep.subr.mxu0 0.0
        %511 = vmatpush2.msra.mxu0 0.0
        %512 = vmatprep.subr.mxu0 0.0
        %513 = vmatpush2.msra.mxu0 0.0
        %514 = vmatprep.subr.mxu0 0.0
        %515 = vmatpush2.msra.mxu0 0.0
        %516 = vmatprep.subr.mxu0 0.0
        %517 = vmatpush2.msra.mxu0 0.0
        %518 = vmatprep.subr.mxu0 0.0
        %519 = vmatpush2.msra.mxu0 0.0
        %520 = vmatprep.subr.mxu0 0.0
        %521 = vmatpush2.msra.mxu0 0.0
        %522 = vmatprep.subr.mxu0 0.0
        %523 = vmatpush2.msra.mxu0 0.0
        %524 = vmatprep.subr.mxu0 0.0
        %525 = vmatpush2.msra.mxu0 0.0
        %526 = vmatprep.subr.mxu0 0.0
        %527 = vmatpush2.msra.mxu0 0.0
        %528 = vmatprep.subr.mxu0 0.0
        %529 = vmatpush2.msra.mxu0 0.0
        %530 = vmatprep.subr.mxu0 0.0
        %531 = vmatpush2.msra.mxu0 0.0
        %532 = vmatprep.mubr.f32.mxu0 0.0
        %533 = vmatmul.mubr.f32.gmra.mxu0 %v466
        %v534 = vpop.f32.mrf.mxu0
        %v535 = vadd.f32 0.0, %v534
        %v536 = vpop.f32.mrf.mxu0
        %537 = vdwg.mxu0
        %v538 = vadd.f32 %v462, %v535
        %539 = vst [vmem:[%s461] sm:$0xff] %v538
        %s540 = scalar_lea.vmem [#allocation2], 24
        %v541 = vld [vmem:[%s540] sm:$0xff]
        %s542 = scalar_lea.vmem %s280, 24
        %v543 = vld [vmem:[%s542] sm:$0xff]
        %v545 = vsel %vm306, %v543, 0
        %547 = vmatprep.subr.mxu0 0.0
        %548 = vmatpush1.msra.mxu0 0.0
        %549 = vmatprep.subr.mxu0 0.0
        %550 = vmatpush1.msra.mxu0 0.0
        %551 = vmatprep.subr.mxu0 0.0
        %552 = vmatpush1.msra.mxu0 0.0
        %553 = vmatprep.subr.mxu0 0.0
        %554 = vmatpush1.msra.mxu0 0.0
        %555 = vmatprep.subr.mxu0 0.0
        %556 = vmatpush1.msra.mxu0 0.0
        %557 = vmatprep.subr.mxu0 0.0
        %558 = vmatpush1.msra.mxu0 0.0
        %559 = vmatprep.subr.mxu0 0.0
        %560 = vmatpush1.msra.mxu0 0.0
        %561 = vmatprep.subr.mxu0 0.0
        %562 = vmatpush1.msra.mxu0 0.0
        %563 = vmatprep.subr.mxu0 0.0
        %564 = vmatpush1.msra.mxu0 0.0
        %565 = vmatprep.subr.mxu0 0.0
        %566 = vmatpush1.msra.mxu0 0.0
        %567 = vmatprep.subr.mxu0 0.0
        %568 = vmatpush1.msra.mxu0 0.0
        %569 = vmatprep.subr.mxu0 0.0
        %570 = vmatpush1.msra.mxu0 0.0
        %571 = vmatprep.subr.mxu0 0.0
        %572 = vmatpush1.msra.mxu0 0.0
        %573 = vmatprep.subr.mxu0 0.0
        %574 = vmatpush1.msra.mxu0 0.0
        %575 = vmatprep.subr.mxu0 0.0
        %576 = vmatpush1.msra.mxu0 0.0
        %577 = vmatprep.subr.mxu0 0.0
        %578 = vmatpush1.msra.mxu0 %v303
        %579 = vmatprep.subr.mxu0 0.0
        %580 = vmatpush2.msra.mxu0 0.0
        %581 = vmatprep.subr.mxu0 0.0
        %582 = vmatpush2.msra.mxu0 0.0
        %583 = vmatprep.subr.mxu0 0.0
        %584 = vmatpush2.msra.mxu0 0.0
        %585 = vmatprep.subr.mxu0 0.0
        %586 = vmatpush2.msra.mxu0 0.0
        %587 = vmatprep.subr.mxu0 0.0
        %588 = vmatpush2.msra.mxu0 0.0
        %589 = vmatprep.subr.mxu0 0.0
        %590 = vmatpush2.msra.mxu0 0.0
        %591 = vmatprep.subr.mxu0 0.0
        %592 = vmatpush2.msra.mxu0 0.0
        %593 = vmatprep.subr.mxu0 0.0
        %594 = vmatpush2.msra.mxu0 0.0
        %595 = vmatprep.subr.mxu0 0.0
        %596 = vmatpush2.msra.mxu0 0.0
        %597 = vmatprep.subr.mxu0 0.0
        %598 = vmatpush2.msra.mxu0 0.0
        %599 = vmatprep.subr.mxu0 0.0
        %600 = vmatpush2.msra.mxu0 0.0
        %601 = vmatprep.subr.mxu0 0.0
        %602 = vmatpush2.msra.mxu0 0.0
        %603 = vmatprep.subr.mxu0 0.0
        %604 = vmatpush2.msra.mxu0 0.0
        %605 = vmatprep.subr.mxu0 0.0
        %606 = vmatpush2.msra.mxu0 0.0
        %607 = vmatprep.subr.mxu0 0.0
        %608 = vmatpush2.msra.mxu0 0.0
        %609 = vmatprep.subr.mxu0 0.0
        %610 = vmatpush2.msra.mxu0 0.0
        %611 = vmatprep.mubr.f32.mxu0 0.0
        %612 = vmatmul.mubr.f32.gmra.mxu0 %v545
        %v613 = vpop.f32.mrf.mxu0
        %v614 = vadd.f32 0.0, %v613
        %v615 = vpop.f32.mrf.mxu0
        %616 = vdwg.mxu0
        %v617 = vadd.f32 %v541, %v614
        %618 = vst [vmem:[%s540] sm:$0xff] %v617
        // Predicated region
        $region41: #{tpu_custom_call.1} parent=35 // pred_check
          %p619 = pneg %p295
        $region42: #{tpu_custom_call.1} parent=35 // pred_check_branch
          %621 = sbr.rel (%p619) target = $region44
        $region43: #{tpu_custom_call.1} parent=35 // pred_region
          %v622 = vld [vmem:[%s294] sm:$0xff]
          %v623 = vld [vmem:[#allocation2] sm:$0xff]
          %v624 = vld [vmem:[#allocation2 + $0x8] sm:$0xff]
          %v625 = vld [vmem:[#allocation2 + $0x10] sm:$0xff]
          %v626 = vld [vmem:[#allocation2 + $0x18] sm:$0xff]
          %628 = vset.pattern.permute.xlu0 32
          %629 = vperm.xlu0 %628, %v623
          %v630 = vpop.permute.xlu0 %629
          %v632 = vmul.f32 %v630, %v622
          %634 = vset.pattern.permute.xlu0 32
          %635 = vperm.xlu0 %634, %v624
          %v636 = vpop.permute.xlu0 %635
          %v638 = vmul.f32 %v636, %v622
          %640 = vset.pattern.permute.xlu0 32
          %641 = vperm.xlu0 %640, %v625
          %v642 = vpop.permute.xlu0 %641
          %v644 = vmul.f32 %v642, %v622
          %646 = vset.pattern.permute.xlu0 32
          %647 = vperm.xlu0 %646, %v626
          %v648 = vpop.permute.xlu0 %647
          %v650 = vmul.f32 %v648, %v622
          %v651 = vld [vmem:[%s3] sm:$0xff]
          %v652 = vld [vmem:[%s3 + $0x8] sm:$0xff]
          %v653 = vld [vmem:[%s3 + $0x10] sm:$0xff]
          %v654 = vld [vmem:[%s3 + $0x18] sm:$0xff]
          %v655 = vld [vmem:[%s3 + $0x20] sm:$0xff]
          %v656 = vld [vmem:[%s3 + $0x28] sm:$0xff]
          %v657 = vld [vmem:[%s3 + $0x30] sm:$0xff]
          %v658 = vld [vmem:[%s3 + $0x38] sm:$0xff]
          %v659 = vld [vmem:[%s3 + $0x40] sm:$0xff]
          %v660 = vld [vmem:[%s3 + $0x48] sm:$0xff]
          %v661 = vld [vmem:[%s3 + $0x50] sm:$0xff]
          %v662 = vld [vmem:[%s3 + $0x58] sm:$0xff]
          %v663 = vld [vmem:[%s3 + $0x60] sm:$0xff]
          %v664 = vld [vmem:[%s3 + $0x68] sm:$0xff]
          %v665 = vld [vmem:[%s3 + $0x70] sm:$0xff]
          %v666 = vld [vmem:[%s3 + $0x78] sm:$0xff]
          %v667 = vld [vmem:[%s3 + $0x80] sm:$0xff]
          %v668 = vld [vmem:[%s3 + $0x88] sm:$0xff]
          %v669 = vld [vmem:[%s3 + $0x90] sm:$0xff]
          %v670 = vld [vmem:[%s3 + $0x98] sm:$0xff]
          %v671 = vld [vmem:[%s3 + $0xa0] sm:$0xff]
          %v672 = vld [vmem:[%s3 + $0xa8] sm:$0xff]
          %v673 = vld [vmem:[%s3 + $0xb0] sm:$0xff]
          %v674 = vld [vmem:[%s3 + $0xb8] sm:$0xff]
          %v675 = vld [vmem:[%s3 + $0xc0] sm:$0xff]
          %v676 = vld [vmem:[%s3 + $0xc8] sm:$0xff]
          %v677 = vld [vmem:[%s3 + $0xd0] sm:$0xff]
          %v678 = vld [vmem:[%s3 + $0xd8] sm:$0xff]
          %v679 = vld [vmem:[%s3 + $0xe0] sm:$0xff]
          %v680 = vld [vmem:[%s3 + $0xe8] sm:$0xff]
          %v681 = vld [vmem:[%s3 + $0xf0] sm:$0xff]
          %v682 = vld [vmem:[%s3 + $0xf8] sm:$0xff]
          %v683 = vld [vmem:[%s3 + $0x100] sm:$0xff]
          %v684 = vld [vmem:[%s3 + $0x108] sm:$0xff]
          %v685 = vld [vmem:[%s3 + $0x110] sm:$0xff]
          %v686 = vld [vmem:[%s3 + $0x118] sm:$0xff]
          %v687 = vld [vmem:[%s3 + $0x120] sm:$0xff]
          %v688 = vld [vmem:[%s3 + $0x128] sm:$0xff]
          %v689 = vld [vmem:[%s3 + $0x130] sm:$0xff]
          %v690 = vld [vmem:[%s3 + $0x138] sm:$0xff]
          %v691 = vld [vmem:[%s3 + $0x140] sm:$0xff]
          %v692 = vld [vmem:[%s3 + $0x148] sm:$0xff]
          %v693 = vld [vmem:[%s3 + $0x150] sm:$0xff]
          %v694 = vld [vmem:[%s3 + $0x158] sm:$0xff]
          %v695 = vld [vmem:[%s3 + $0x160] sm:$0xff]
          %v696 = vld [vmem:[%s3 + $0x168] sm:$0xff]
          %v697 = vld [vmem:[%s3 + $0x170] sm:$0xff]
          %v698 = vld [vmem:[%s3 + $0x178] sm:$0xff]
          %v699 = vld [vmem:[%s3 + $0x180] sm:$0xff]
          %v700 = vld [vmem:[%s3 + $0x188] sm:$0xff]
          %v701 = vld [vmem:[%s3 + $0x190] sm:$0xff]
          %v702 = vld [vmem:[%s3 + $0x198] sm:$0xff]
          %v703 = vld [vmem:[%s3 + $0x1a0] sm:$0xff]
          %v704 = vld [vmem:[%s3 + $0x1a8] sm:$0xff]
          %v705 = vld [vmem:[%s3 + $0x1b0] sm:$0xff]
          %v706 = vld [vmem:[%s3 + $0x1b8] sm:$0xff]
          %v707 = vld [vmem:[%s3 + $0x1c0] sm:$0xff]
          %v708 = vld [vmem:[%s3 + $0x1c8] sm:$0xff]
          %v709 = vld [vmem:[%s3 + $0x1d0] sm:$0xff]
          %v710 = vld [vmem:[%s3 + $0x1d8] sm:$0xff]
          %v711 = vld [vmem:[%s3 + $0x1e0] sm:$0xff]
          %v712 = vld [vmem:[%s3 + $0x1e8] sm:$0xff]
          %v713 = vld [vmem:[%s3 + $0x1f0] sm:$0xff]
          %v714 = vld [vmem:[%s3 + $0x1f8] sm:$0xff]
          %v715 = vld [vmem:[%s3 + $0x200] sm:$0xff]
          %v716 = vld [vmem:[%s3 + $0x208] sm:$0xff]
          %v717 = vld [vmem:[%s3 + $0x210] sm:$0xff]
          %v718 = vld [vmem:[%s3 + $0x218] sm:$0xff]
          %v719 = vld [vmem:[%s3 + $0x220] sm:$0xff]
          %v720 = vld [vmem:[%s3 + $0x228] sm:$0xff]
          %v721 = vld [vmem:[%s3 + $0x230] sm:$0xff]
          %v722 = vld [vmem:[%s3 + $0x238] sm:$0xff]
          %v723 = vld [vmem:[%s3 + $0x240] sm:$0xff]
          %v724 = vld [vmem:[%s3 + $0x248] sm:$0xff]
          %v725 = vld [vmem:[%s3 + $0x250] sm:$0xff]
          %v726 = vld [vmem:[%s3 + $0x258] sm:$0xff]
          %v727 = vld [vmem:[%s3 + $0x260] sm:$0xff]
          %v728 = vld [vmem:[%s3 + $0x268] sm:$0xff]
          %v729 = vld [vmem:[%s3 + $0x270] sm:$0xff]
          %v730 = vld [vmem:[%s3 + $0x278] sm:$0xff]
          %v731 = vld [vmem:[%s3 + $0x280] sm:$0xff]
          %v732 = vld [vmem:[%s3 + $0x288] sm:$0xff]
          %v733 = vld [vmem:[%s3 + $0x290] sm:$0xff]
          %v734 = vld [vmem:[%s3 + $0x298] sm:$0xff]
          %v735 = vld [vmem:[%s3 + $0x2a0] sm:$0xff]
          %v736 = vld [vmem:[%s3 + $0x2a8] sm:$0xff]
          %v737 = vld [vmem:[%s3 + $0x2b0] sm:$0xff]
          %v738 = vld [vmem:[%s3 + $0x2b8] sm:$0xff]
          %v739 = vld [vmem:[%s3 + $0x2c0] sm:$0xff]
          %v740 = vld [vmem:[%s3 + $0x2c8] sm:$0xff]
          %v741 = vld [vmem:[%s3 + $0x2d0] sm:$0xff]
          %v742 = vld [vmem:[%s3 + $0x2d8] sm:$0xff]
          %v743 = vld [vmem:[%s3 + $0x2e0] sm:$0xff]
          %v744 = vld [vmem:[%s3 + $0x2e8] sm:$0xff]
          %v745 = vld [vmem:[%s3 + $0x2f0] sm:$0xff]
          %v746 = vld [vmem:[%s3 + $0x2f8] sm:$0xff]
          %v747 = vld [vmem:[%s3 + $0x300] sm:$0xff]
          %v748 = vld [vmem:[%s3 + $0x308] sm:$0xff]
          %v749 = vld [vmem:[%s3 + $0x310] sm:$0xff]
          %v750 = vld [vmem:[%s3 + $0x318] sm:$0xff]
          %v751 = vld [vmem:[%s3 + $0x320] sm:$0xff]
          %v752 = vld [vmem:[%s3 + $0x328] sm:$0xff]
          %v753 = vld [vmem:[%s3 + $0x330] sm:$0xff]
          %v754 = vld [vmem:[%s3 + $0x338] sm:$0xff]
          %v755 = vld [vmem:[%s3 + $0x340] sm:$0xff]
          %v756 = vld [vmem:[%s3 + $0x348] sm:$0xff]
          %v757 = vld [vmem:[%s3 + $0x350] sm:$0xff]
          %v758 = vld [vmem:[%s3 + $0x358] sm:$0xff]
          %v759 = vld [vmem:[%s3 + $0x360] sm:$0xff]
          %v760 = vld [vmem:[%s3 + $0x368] sm:$0xff]
          %v761 = vld [vmem:[%s3 + $0x370] sm:$0xff]
          %v762 = vld [vmem:[%s3 + $0x378] sm:$0xff]
          %v763 = vld [vmem:[%s3 + $0x380] sm:$0xff]
          %v764 = vld [vmem:[%s3 + $0x388] sm:$0xff]
          %v765 = vld [vmem:[%s3 + $0x390] sm:$0xff]
          %v766 = vld [vmem:[%s3 + $0x398] sm:$0xff]
          %v767 = vld [vmem:[%s3 + $0x3a0] sm:$0xff]
          %v768 = vld [vmem:[%s3 + $0x3a8] sm:$0xff]
          %v769 = vld [vmem:[%s3 + $0x3b0] sm:$0xff]
          %v770 = vld [vmem:[%s3 + $0x3b8] sm:$0xff]
          %v771 = vld [vmem:[%s3 + $0x3c0] sm:$0xff]
          %v772 = vld [vmem:[%s3 + $0x3c8] sm:$0xff]
          %v773 = vld [vmem:[%s3 + $0x3d0] sm:$0xff]
          %v774 = vld [vmem:[%s3 + $0x3d8] sm:$0xff]
          %v775 = vld [vmem:[%s3 + $0x3e0] sm:$0xff]
          %v776 = vld [vmem:[%s3 + $0x3e8] sm:$0xff]
          %v777 = vld [vmem:[%s3 + $0x3f0] sm:$0xff]
          %v778 = vld [vmem:[%s3 + $0x3f8] sm:$0xff]
          %v779 = vld [vmem:[%s3 + $0x400] sm:$0xff]
          %v780 = vld [vmem:[%s3 + $0x408] sm:$0xff]
          %v781 = vld [vmem:[%s3 + $0x410] sm:$0xff]
          %v782 = vld [vmem:[%s3 + $0x418] sm:$0xff]
          %v783 = vld [vmem:[%s3 + $0x420] sm:$0xff]
          %v784 = vld [vmem:[%s3 + $0x428] sm:$0xff]
          %v785 = vld [vmem:[%s3 + $0x430] sm:$0xff]
          %v786 = vld [vmem:[%s3 + $0x438] sm:$0xff]
          %v787 = vld [vmem:[%s3 + $0x440] sm:$0xff]
          %v788 = vld [vmem:[%s3 + $0x448] sm:$0xff]
          %v789 = vld [vmem:[%s3 + $0x450] sm:$0xff]
          %v790 = vld [vmem:[%s3 + $0x458] sm:$0xff]
          %v791 = vld [vmem:[%s3 + $0x460] sm:$0xff]
          %v792 = vld [vmem:[%s3 + $0x468] sm:$0xff]
          %v793 = vld [vmem:[%s3 + $0x470] sm:$0xff]
          %v794 = vld [vmem:[%s3 + $0x478] sm:$0xff]
          %795 = vmatprep.subr.mxu0 0.0
          %796 = vmatpush1.msra.mxu0 %v666
          %797 = vmatprep.subr.mxu0 0.0
          %798 = vmatpush1.msra.mxu0 %v665
          %799 = vmatprep.subr.mxu0 0.0
          %800 = vmatpush1.msra.mxu0 %v664
          %801 = vmatprep.subr.mxu0 0.0
          %802 = vmatpush1.msra.mxu0 %v663
          %803 = vmatprep.subr.mxu0 0.0
          %804 = vmatpush1.msra.mxu0 %v662
          %805 = vmatprep.subr.mxu0 0.0
          %806 = vmatpush1.msra.mxu0 %v661
          %807 = vmatprep.subr.mxu0 0.0
          %808 = vmatpush1.msra.mxu0 %v660
          %809 = vmatprep.subr.mxu0 0.0
          %810 = vmatpush1.msra.mxu0 %v659
          %811 = vmatprep.subr.mxu0 0.0
          %812 = vmatpush1.msra.mxu0 %v658
          %813 = vmatprep.subr.mxu0 0.0
          %814 = vmatpush1.msra.mxu0 %v657
          %815 = vmatprep.subr.mxu0 0.0
          %816 = vmatpush1.msra.mxu0 %v656
          %817 = vmatprep.subr.mxu0 0.0
          %818 = vmatpush1.msra.mxu0 %v655
          %819 = vmatprep.subr.mxu0 0.0
          %820 = vmatpush1.msra.mxu0 %v654
          %821 = vmatprep.subr.mxu0 0.0
          %822 = vmatpush1.msra.mxu0 %v653
          %823 = vmatprep.subr.mxu0 0.0
          %824 = vmatpush1.msra.mxu0 %v652
          %825 = vmatprep.subr.mxu0 0.0
          %826 = vmatpush1.msra.mxu0 %v651
          %827 = vmatprep.subr.mxu0 0.0
          %828 = vmatpush2.msra.mxu0 %v682
          %829 = vmatprep.subr.mxu0 0.0
          %830 = vmatpush2.msra.mxu0 %v681
          %831 = vmatprep.subr.mxu0 0.0
          %832 = vmatpush2.msra.mxu0 %v680
          %833 = vmatprep.subr.mxu0 0.0
          %834 = vmatpush2.msra.mxu0 %v679
          %835 = vmatprep.subr.mxu0 0.0
          %836 = vmatpush2.msra.mxu0 %v678
          %837 = vmatprep.subr.mxu0 0.0
          %838 = vmatpush2.msra.mxu0 %v677
          %839 = vmatprep.subr.mxu0 0.0
          %840 = vmatpush2.msra.mxu0 %v676
          %841 = vmatprep.subr.mxu0 0.0
          %842 = vmatpush2.msra.mxu0 %v675
          %843 = vmatprep.subr.mxu0 0.0
          %844 = vmatpush2.msra.mxu0 %v674
          %845 = vmatprep.subr.mxu0 0.0
          %846 = vmatpush2.msra.mxu0 %v673
          %847 = vmatprep.subr.mxu0 0.0
          %848 = vmatpush2.msra.mxu0 %v672
          %849 = vmatprep.subr.mxu0 0.0
          %850 = vmatpush2.msra.mxu0 %v671
          %851 = vmatprep.subr.mxu0 0.0
          %852 = vmatpush2.msra.mxu0 %v670
          %853 = vmatprep.subr.mxu0 0.0
          %854 = vmatpush2.msra.mxu0 %v669
          %855 = vmatprep.subr.mxu0 0.0
          %856 = vmatpush2.msra.mxu0 %v668
          %857 = vmatprep.subr.mxu0 0.0
          %858 = vmatpush2.msra.mxu0 %v667
          %859 = vmatprep.mubr.f32.mxu0 %v632
          %860 = vmatmul.mubr.f32.gmra.mxu0 %v622
          %v861 = vpop.f32.mrf.mxu0
          %v862 = vadd.f32 0.0, %v861
          %v863 = vpop.f32.mrf.mxu0
          %864 = vdwg.mxu0
          %865 = vmatprep.subr.mxu0 0.0
          %866 = vmatpush1.msra.mxu0 %v698
          %867 = vmatprep.subr.mxu0 0.0
          %868 = vmatpush1.msra.mxu0 %v697
          %869 = vmatprep.subr.mxu0 0.0
          %870 = vmatpush1.msra.mxu0 %v696
          %871 = vmatprep.subr.mxu0 0.0
          %872 = vmatpush1.msra.mxu0 %v695
          %873 = vmatprep.subr.mxu0 0.0
          %874 = vmatpush1.msra.mxu0 %v694
          %875 = vmatprep.subr.mxu0 0.0
          %876 = vmatpush1.msra.mxu0 %v693
          %877 = vmatprep.subr.mxu0 0.0
          %878 = vmatpush1.msra.mxu0 %v692
          %879 = vmatprep.subr.mxu0 0.0
          %880 = vmatpush1.msra.mxu0 %v691
          %881 = vmatprep.subr.mxu0 0.0
          %882 = vmatpush1.msra.mxu0 %v690
          %883 = vmatprep.subr.mxu0 0.0
          %884 = vmatpush1.msra.mxu0 %v689
          %885 = vmatprep.subr.mxu0 0.0
          %886 = vmatpush1.msra.mxu0 %v688
          %887 = vmatprep.subr.mxu0 0.0
          %888 = vmatpush1.msra.mxu0 %v687
          %889 = vmatprep.subr.mxu0 0.0
          %890 = vmatpush1.msra.mxu0 %v686
          %891 = vmatprep.subr.mxu0 0.0
          %892 = vmatpush1.msra.mxu0 %v685
          %893 = vmatprep.subr.mxu0 0.0
          %894 = vmatpush1.msra.mxu0 %v684
          %895 = vmatprep.subr.mxu0 0.0
          %896 = vmatpush1.msra.mxu0 %v683
          %897 = vmatprep.subr.mxu0 0.0
          %898 = vmatpush2.msra.mxu0 %v714
          %899 = vmatprep.subr.mxu0 0.0
          %900 = vmatpush2.msra.mxu0 %v713
          %901 = vmatprep.subr.mxu0 0.0
          %902 = vmatpush2.msra.mxu0 %v712
          %903 = vmatprep.subr.mxu0 0.0
          %904 = vmatpush2.msra.mxu0 %v711
          %905 = vmatprep.subr.mxu0 0.0
          %906 = vmatpush2.msra.mxu0 %v710
          %907 = vmatprep.subr.mxu0 0.0
          %908 = vmatpush2.msra.mxu0 %v709
          %909 = vmatprep.subr.mxu0 0.0
          %910 = vmatpush2.msra.mxu0 %v708
          %911 = vmatprep.subr.mxu0 0.0
          %912 = vmatpush2.msra.mxu0 %v707
          %913 = vmatprep.subr.mxu0 0.0
          %914 = vmatpush2.msra.mxu0 %v706
          %915 = vmatprep.subr.mxu0 0.0
          %916 = vmatpush2.msra.mxu0 %v705
          %917 = vmatprep.subr.mxu0 0.0
          %918 = vmatpush2.msra.mxu0 %v704
          %919 = vmatprep.subr.mxu0 0.0
          %920 = vmatpush2.msra.mxu0 %v703
          %921 = vmatprep.subr.mxu0 0.0
          %922 = vmatpush2.msra.mxu0 %v702
          %923 = vmatprep.subr.mxu0 0.0
          %924 = vmatpush2.msra.mxu0 %v701
          %925 = vmatprep.subr.mxu0 0.0
          %926 = vmatpush2.msra.mxu0 %v700
          %927 = vmatprep.subr.mxu0 0.0
          %928 = vmatpush2.msra.mxu0 %v699
          %929 = vmatprep.mubr.f32.mxu0 %v644
          %930 = vmatmul.mubr.f32.gmra.mxu0 %v638
          %v931 = vpop.f32.mrf.mxu0
          %v932 = vadd.f32 %v862, %v931
          %v933 = vpop.f32.mrf.mxu0
          %934 = vdwg.mxu0
          %935 = vmatprep.subr.mxu0 0.0
          %936 = vmatpush1.msra.mxu0 %v730
          %937 = vmatprep.subr.mxu0 0.0
          %938 = vmatpush1.msra.mxu0 %v729
          %939 = vmatprep.subr.mxu0 0.0
          %940 = vmatpush1.msra.mxu0 %v728
          %941 = vmatprep.subr.mxu0 0.0
          %942 = vmatpush1.msra.mxu0 %v727
          %943 = vmatprep.subr.mxu0 0.0
          %944 = vmatpush1.msra.mxu0 %v726
          %945 = vmatprep.subr.mxu0 0.0
          %946 = vmatpush1.msra.mxu0 %v725
          %947 = vmatprep.subr.mxu0 0.0
          %948 = vmatpush1.msra.mxu0 %v724
          %949 = vmatprep.subr.mxu0 0.0
          %950 = vmatpush1.msra.mxu0 %v723
          %951 = vmatprep.subr.mxu0 0.0
          %952 = vmatpush1.msra.mxu0 %v722
          %953 = vmatprep.subr.mxu0 0.0
          %954 = vmatpush1.msra.mxu0 %v721
          %955 = vmatprep.subr.mxu0 0.0
          %956 = vmatpush1.msra.mxu0 %v720
          %957 = vmatprep.subr.mxu0 0.0
          %958 = vmatpush1.msra.mxu0 %v719
          %959 = vmatprep.subr.mxu0 0.0
          %960 = vmatpush1.msra.mxu0 %v718
          %961 = vmatprep.subr.mxu0 0.0
          %962 = vmatpush1.msra.mxu0 %v717
          %963 = vmatprep.subr.mxu0 0.0
          %964 = vmatpush1.msra.mxu0 %v716
          %965 = vmatprep.subr.mxu0 0.0
          %966 = vmatpush1.msra.mxu0 %v715
          %967 = vmatprep.subr.mxu0 0.0
          %968 = vmatpush2.msra.mxu0 %v746
          %969 = vmatprep.subr.mxu0 0.0
          %970 = vmatpush2.msra.mxu0 %v745
          %971 = vmatprep.subr.mxu0 0.0
          %972 = vmatpush2.msra.mxu0 %v744
          %973 = vmatprep.subr.mxu0 0.0
          %974 = vmatpush2.msra.mxu0 %v743
          %975 = vmatprep.subr.mxu0 0.0
          %976 = vmatpush2.msra.mxu0 %v742
          %977 = vmatprep.subr.mxu0 0.0
          %978 = vmatpush2.msra.mxu0 %v741
          %979 = vmatprep.subr.mxu0 0.0
          %980 = vmatpush2.msra.mxu0 %v740
          %981 = vmatprep.subr.mxu0 0.0
          %982 = vmatpush2.msra.mxu0 %v739
          %983 = vmatprep.subr.mxu0 0.0
          %984 = vmatpush2.msra.mxu0 %v738
          %985 = vmatprep.subr.mxu0 0.0
          %986 = vmatpush2.msra.mxu0 %v737
          %987 = vmatprep.subr.mxu0 0.0
          %988 = vmatpush2.msra.mxu0 %v736
          %989 = vmatprep.subr.mxu0 0.0
          %990 = vmatpush2.msra.mxu0 %v735
          %991 = vmatprep.subr.mxu0 0.0
          %992 = vmatpush2.msra.mxu0 %v734
          %993 = vmatprep.subr.mxu0 0.0
          %994 = vmatpush2.msra.mxu0 %v733
          %995 = vmatprep.subr.mxu0 0.0
          %996 = vmatpush2.msra.mxu0 %v732
          %997 = vmatprep.subr.mxu0 0.0
          %998 = vmatpush2.msra.mxu0 %v731
          %999 = vmatprep.mubr.f32.mxu0 %v623
          %1000 = vmatmul.mubr.f32.gmra.mxu0 %v650
          %v1001 = vpop.f32.mrf.mxu0
          %v1002 = vadd.f32 %v932, %v1001
          %v1003 = vpop.f32.mrf.mxu0
          %1004 = vdwg.mxu0
          %1005 = vmatprep.subr.mxu0 0.0
          %1006 = vmatpush1.msra.mxu0 %v762
          %1007 = vmatprep.subr.mxu0 0.0
          %1008 = vmatpush1.msra.mxu0 %v761
          %1009 = vmatprep.subr.mxu0 0.0
          %1010 = vmatpush1.msra.mxu0 %v760
          %1011 = vmatprep.subr.mxu0 0.0
          %1012 = vmatpush1.msra.mxu0 %v759
          %1013 = vmatprep.subr.mxu0 0.0
          %1014 = vmatpush1.msra.mxu0 %v758
          %1015 = vmatprep.subr.mxu0 0.0
          %1016 = vmatpush1.msra.mxu0 %v757
          %1017 = vmatprep.subr.mxu0 0.0
          %1018 = vmatpush1.msra.mxu0 %v756
          %1019 = vmatprep.subr.mxu0 0.0
          %1020 = vmatpush1.msra.mxu0 %v755
          %1021 = vmatprep.subr.mxu0 0.0
          %1022 = vmatpush1.msra.mxu0 %v754
          %1023 = vmatprep.subr.mxu0 0.0
          %1024 = vmatpush1.msra.mxu0 %v753
          %1025 = vmatprep.subr.mxu0 0.0
          %1026 = vmatpush1.msra.mxu0 %v752
          %1027 = vmatprep.subr.mxu0 0.0
          %1028 = vmatpush1.msra.mxu0 %v751
          %1029 = vmatprep.subr.mxu0 0.0
          %1030 = vmatpush1.msra.mxu0 %v750
          %1031 = vmatprep.subr.mxu0 0.0
          %1032 = vmatpush1.msra.mxu0 %v749
          %1033 = vmatprep.subr.mxu0 0.0
          %1034 = vmatpush1.msra.mxu0 %v748
          %1035 = vmatprep.subr.mxu0 0.0
          %1036 = vmatpush1.msra.mxu0 %v747
          %1037 = vmatprep.subr.mxu0 0.0
          %1038 = vmatpush2.msra.mxu0 %v778
          %1039 = vmatprep.subr.mxu0 0.0
          %1040 = vmatpush2.msra.mxu0 %v777
          %1041 = vmatprep.subr.mxu0 0.0
          %1042 = vmatpush2.msra.mxu0 %v776
          %1043 = vmatprep.subr.mxu0 0.0
          %1044 = vmatpush2.msra.mxu0 %v775
          %1045 = vmatprep.subr.mxu0 0.0
          %1046 = vmatpush2.msra.mxu0 %v774
          %1047 = vmatprep.subr.mxu0 0.0
          %1048 = vmatpush2.msra.mxu0 %v773
          %1049 = vmatprep.subr.mxu0 0.0
          %1050 = vmatpush2.msra.mxu0 %v772
          %1051 = vmatprep.subr.mxu0 0.0
          %1052 = vmatpush2.msra.mxu0 %v771
          %1053 = vmatprep.subr.mxu0 0.0
          %1054 = vmatpush2.msra.mxu0 %v770
          %1055 = vmatprep.subr.mxu0 0.0
          %1056 = vmatpush2.msra.mxu0 %v769
          %1057 = vmatprep.subr.mxu0 0.0
          %1058 = vmatpush2.msra.mxu0 %v768
          %1059 = vmatprep.subr.mxu0 0.0
          %1060 = vmatpush2.msra.mxu0 %v767
          %1061 = vmatprep.subr.mxu0 0.0
          %1062 = vmatpush2.msra.mxu0 %v766
          %1063 = vmatprep.subr.mxu0 0.0
          %1064 = vmatpush2.msra.mxu0 %v765
          %1065 = vmatprep.subr.mxu0 0.0
          %1066 = vmatpush2.msra.mxu0 %v764
          %1067 = vmatprep.subr.mxu0 0.0
          %1068 = vmatpush2.msra.mxu0 %v763
          %1069 = vmatprep.mubr.f32.mxu0 %v625
          %1070 = vmatmul.mubr.f32.gmra.mxu0 %v624
          %v1071 = vpop.f32.mrf.mxu0
          %v1072 = vadd.f32 %v1002, %v1071
          %v1073 = vpop.f32.mrf.mxu0
          %1074 = vdwg.mxu0
          %1075 = vmatprep.subr.mxu0 0.0
          %1076 = vmatpush1.msra.mxu0 %v794
          %1077 = vmatprep.subr.mxu0 0.0
          %1078 = vmatpush1.msra.mxu0 %v793
          %1079 = vmatprep.subr.mxu0 0.0
          %1080 = vmatpush1.msra.mxu0 %v792
          %1081 = vmatprep.subr.mxu0 0.0
          %1082 = vmatpush1.msra.mxu0 %v791
          %1083 = vmatprep.subr.mxu0 0.0
          %1084 = vmatpush1.msra.mxu0 %v790
          %1085 = vmatprep.subr.mxu0 0.0
          %1086 = vmatpush1.msra.mxu0 %v789
          %1087 = vmatprep.subr.mxu0 0.0
          %1088 = vmatpush1.msra.mxu0 %v788
          %1089 = vmatprep.subr.mxu0 0.0
          %1090 = vmatpush1.msra.mxu0 %v787
          %1091 = vmatprep.subr.mxu0 0.0
          %1092 = vmatpush1.msra.mxu0 %v786
          %1093 = vmatprep.subr.mxu0 0.0
          %1094 = vmatpush1.msra.mxu0 %v785
          %1095 = vmatprep.subr.mxu0 0.0
          %1096 = vmatpush1.msra.mxu0 %v784
          %1097 = vmatprep.subr.mxu0 0.0
          %1098 = vmatpush1.msra.mxu0 %v783
          %1099 = vmatprep.subr.mxu0 0.0
          %1100 = vmatpush1.msra.mxu0 %v782
          %1101 = vmatprep.subr.mxu0 0.0
          %1102 = vmatpush1.msra.mxu0 %v781
          %1103 = vmatprep.subr.mxu0 0.0
          %1104 = vmatpush1.msra.mxu0 %v780
          %1105 = vmatprep.subr.mxu0 0.0
          %1106 = vmatpush1.msra.mxu0 %v779
          %1107 = vmatprep.subr.mxu0 0.0
          %1108 = vmatpush2.msra.mxu0 0.0
          %1109 = vmatprep.subr.mxu0 0.0
          %1110 = vmatpush2.msra.mxu0 0.0
          %1111 = vmatprep.subr.mxu0 0.0
          %1112 = vmatpush2.msra.mxu0 0.0
          %1113 = vmatprep.subr.mxu0 0.0
          %1114 = vmatpush2.msra.mxu0 0.0
          %1115 = vmatprep.subr.mxu0 0.0
          %1116 = vmatpush2.msra.mxu0 0.0
          %1117 = vmatprep.subr.mxu0 0.0
          %1118 = vmatpush2.msra.mxu0 0.0
          %1119 = vmatprep.subr.mxu0 0.0
          %1120 = vmatpush2.msra.mxu0 0.0
          %1121 = vmatprep.subr.mxu0 0.0
          %1122 = vmatpush2.msra.mxu0 0.0
          %1123 = vmatprep.subr.mxu0 0.0
          %1124 = vmatpush2.msra.mxu0 0.0
          %1125 = vmatprep.subr.mxu0 0.0
          %1126 = vmatpush2.msra.mxu0 0.0
          %1127 = vmatprep.subr.mxu0 0.0
          %1128 = vmatpush2.msra.mxu0 0.0
          %1129 = vmatprep.subr.mxu0 0.0
          %1130 = vmatpush2.msra.mxu0 0.0
          %1131 = vmatprep.subr.mxu0 0.0
          %1132 = vmatpush2.msra.mxu0 0.0
          %1133 = vmatprep.subr.mxu0 0.0
          %1134 = vmatpush2.msra.mxu0 0.0
          %1135 = vmatprep.subr.mxu0 0.0
          %1136 = vmatpush2.msra.mxu0 0.0
          %1137 = vmatprep.subr.mxu0 0.0
          %1138 = vmatpush2.msra.mxu0 0.0
          %1139 = vmatprep.mubr.f32.mxu0 0.0
          %1140 = vmatmul.mubr.f32.gmra.mxu0 %v626
          %v1141 = vpop.f32.mrf.mxu0
          %v1142 = vadd.f32 %v1072, %v1141
          %v1143 = vpop.f32.mrf.mxu0
          %1144 = vdwg.mxu0
          %v1145 = vsub.f32 0.0, %v1142
          %v1146 = vmul.f32 %v1145, 1.442695
          %v1147 = vpow.pop %v1146
          %v1148 = vadd.f32 %v1147, 1.0
          %v1149 = vrcp.pop %v1148
          %vm1150 = vcmask 261120
          %1151 = vst.msk [vmem:[%s269] sm:$0xff] %vm1150, %v1149
        $region44: #{tpu_custom_call.1} parent=35 // pred_fallthru
          _
        %s1152 = sand.u32 %s154, 1
        %s1153 = scalar_lea.sflag [#allocation4], %s1152
        %s1154 = sand.u32 %s154, 1
        %s1155 = smul.addr %s1154, 8
        %s1156 = scalar_lea.vmem [#allocation3], %s1155
        // Predicated region
        $region45: #{tpu_custom_call.1} parent=35 // pred_check
          %p1157 = pneg %p164
        $region46: #{tpu_custom_call.1} parent=35 // pred_check_branch
          %1159 = sbr.rel (%p1157) target = $region48
        $region47: #{tpu_custom_call.1} parent=35 // pred_region
          %s1161 = ssub.s32 128, 128
          %1162 = vsyncadd %s1153, %s1161
          %s1163 = sadd.s32 %s24, %s23
          %s1164 = smul.addr %s1163, 128
          %s1165 = scalar_lea.hbm %s4, %s1164
          %s1167 = sshll.u32 %s1156, 4
          %s1168 = int_to_ptr.vmem [resolvable:$true] %s1167
          %1170 = dma.vmem_to_hbm [thread:$0]  %s1168, 128, %s1165, %s1153
        $region48: #{tpu_custom_call.1} parent=35 // pred_fallthru
          _
      $region36: #{tpu_custom_call.1} parent=5 // pred_fallthru
        _
      %p1171 = scmp.le.s32.totalorder 2, %s13
      // Predicated region
      $region49: #{tpu_custom_call.1} parent=5 // pred_check
        %p1172 = pneg %p1171
      $region50: #{tpu_custom_call.1} parent=5 // pred_check_branch
        %1174 = sbr.rel (%p1172) target = $region52
      $region51: #{tpu_custom_call.1} parent=5 // pred_region
        %s1175 = ssub.s32 %s13, 2
        // Predicated region
        $region53: #{tpu_custom_call.1} parent=51 // pred_check
          %p1176 = pneg %p170
        $region54: #{tpu_custom_call.1} parent=51 // pred_check_branch
          %1178 = sbr.rel (%p1176) target = $region56
        $region55: #{tpu_custom_call.1} parent=51 // pred_region
          %s1179 = sand.u32 %s155, 1
          %s1180 = scalar_lea.sflag [#allocation4], %s1179
          %s1181 = sand.u32 %s155, 1
          %s1182 = smul.addr %s1181, 8
          %s1183 = scalar_lea.vmem [#allocation3], %s1182
          %1184 = dma.done %s1180, 128
        $region56: #{tpu_custom_call.1} parent=51 // pred_fallthru
          _
      $region52: #{tpu_custom_call.1} parent=5 // pred_fallthru
        _
    $region6: #{tpu_custom_call.1} parent=1 // loop_footer
      %s17 = sadd.s32 1, %s13
    $region7: #{tpu_custom_call.1} parent=1 // loop_footer_branch
      %12 = sbr.rel target = $region3
    $region8: #{tpu_custom_call.1} parent=1 // loop_exit
      _
    %1185 = vsyncpa [#allocation4], 1
    %s1186 = scalar_lea.sflag [#allocation4], 1
    %1187 = vsyncpa %s1186, 1

</llo_original>
